<compile_context>
chip_gen: v5e
topology: v5e:2x2
jax: 0.10.0
libtpu: 0.0.40
codegen_flags: <defaults>
</compile_context>

<pallas_src>
import jax
import jax.numpy as jnp
from jax import lax
from jax.experimental import pallas as pl
from jax.experimental.pallas import tpu as pltpu


# -----------------------------------------------------------------------------
# Fused n-layer projected-LSTM kernel (PyTorch LSTM proj_size semantics).
#   gates = x_t @ W_ih + h_proj @ W_hh + (b_ih + b_hh);  gate order i, f, g, o
#   c_t = f*c + i*g ; h_full = o*tanh(c_t) ; h_proj = h_full @ W_hr
# The recurrence carries the pre-projection hidden h_full and uses
# R = W_hr @ W_hh; W_hr is folded into the next layer's input matmul (A) and the
# final output projection (W_out).
# -----------------------------------------------------------------------------
def make_fused_lstm_kernel(n_layers, T, BP, H, max_static_diags=24):
    H4 = 4 * H
    L = n_layers
    n_diag = T + L - 1  # number of wavefront diagonals

    def kernel(*refs):
        xin_ref = refs[0]                        # (T*BP, Din) time-major, batch-padded
        layer_refs = refs[1:1 + 3 * L]           # per layer: A (Dsrc,4H), R (H,4H), b (1,4H)
        wout_ref = refs[1 + 3 * L]               # (H, P) deferred output projection
        y_ref = refs[2 + 3 * L]                  # (T*BP, P) output
        xw_ref = refs[3 + 3 * L]                 # scratch (T*BP, 4H): layer-0 input proj
        hseq_ref = refs[4 + 3 * L]               # scratch (T*BP, H):  last-layer hidden seq

        # Hoist all weight/bias reads (and the (1,4H)->(BP,4H) bias broadcasts)
        # out of the serial loops — JAX does not CSE broadcast_in_dim.
        A = [layer_refs[3 * l + 0][...] for l in range(L)]
        R = [layer_refs[3 * l + 1][...] for l in range(L)]
        b_raw = [layer_refs[3 * l + 2][...] for l in range(L)]          # (1, 4H)
        b = [None] + [jnp.broadcast_to(b_raw[l], (BP, H4)) for l in range(1, L)]
        mxu_dt = A[0].dtype

        # Layer-0 input contribution for ALL timesteps: ONE MXU matmul, bias folded.
        xw_ref[...] = (
            jnp.dot(xin_ref[...], A[0], preferred_element_type=jnp.float32)
            + b_raw[0]
        )

        def row_of(t):
            r = t * BP
            # alignment hint only matters for dynamic (fori_loop) indices
            return r if isinstance(r, int) else pl.multiple_of(r, BP)

        def lstm_cell(gates, c):
            # gates: (BP, 4H) f32, gate order [i | f | g | o]; c: (BP, H) f32.
            sig = jax.nn.sigmoid(gates)          # full-width EUP pass
            th = jnp.tanh(gates)                 # full-width EUP pass
            # i*g: one explicit XLU lane roll by 2H (half of 4H, so the rotate is
            # direction-agnostic) + full-width VPU multiply; slice at offset 0 is free.
            ig = (sig * pltpu.roll(th, shift=2 * H, axis=1))[:, :H]
            f_g = sig[:, H:2 * H]
            o_g = sig[:, 3 * H:4 * H]
            c_new = f_g * c + ig
            h_new = o_g * jnp.tanh(c_new)        # (BP, H) pre-projection hidden
            return h_new, c_new

        def layer_step(l, t, h_prev_layer, h, c):
            # One LSTM cell of layer `l` at time `t` (a single wavefront node).
            if l == 0:
                g_in = xw_ref[pl.ds(row_of(t), BP), :]          # aligned (BP, 4H) slab
            else:
                # Inter-layer projection folded into A_l (= W_hr_{l-1} @ W_ih_l).
                g_in = jnp.dot(h_prev_layer.astype(mxu_dt), A[l],
                               preferred_element_type=jnp.float32) + b[l]
            gates = g_in + jnp.dot(h.astype(mxu_dt), R[l],
                                   preferred_element_type=jnp.float32)
            h_new, c_new = lstm_cell(gates, c)
            if l == L - 1:
                hseq_ref[pl.ds(row_of(t), BP), :] = h_new        # aligned (BP, H) slab
            return h_new, c_new

        def diagonal(d, hs, cs, lo, hi):
            # Layers lo..hi-1 are active on diagonal d (layer l handles t = d - l).
            # Every active layer reads only state produced on diagonal d-1, so the
            # per-layer chains are independent and can be overlapped by the scheduler.
            new_hs, new_cs = list(hs), list(cs)
            for l in range(lo, hi):
                new_hs[l], new_cs[l] = layer_step(
                    l, d - l, hs[l - 1] if l else None, hs[l], cs[l])
            return new_hs, new_cs

        zero = jnp.zeros((BP, H), jnp.float32)
        hs, cs = [zero] * L, [zero] * L

        if n_diag <= max_static_diags or T < L:
            # Short sequence: fully static wavefront (ramp boundaries resolved at
            # trace time; everything visible to the LLO scheduler).
            for d in range(n_diag):
                hs, cs = diagonal(d, hs, cs, max(0, d - T + 1), min(L, d + 1))
        else:
            # Long sequence: static ramp-up, partially unrolled steady state,
            # static ramp-down (bounds vreg pressure and compile time).
            for d in range(L - 1):
                hs, cs = diagonal(d, hs, cs, 0, d + 1)

            def body(d, carry):
                hs_c, cs_c = carry
                hs_n, cs_n = diagonal(d, list(hs_c), list(cs_c), 0, L)
                return tuple(hs_n), tuple(cs_n)

            hs_t, cs_t = lax.fori_loop(L - 1, T, body, (tuple(hs), tuple(cs)),
                                       unroll=8)
            hs, cs = list(hs_t), list(cs_t)
            for d in range(T, n_diag):
                hs, cs = diagonal(d, hs, cs, d - T + 1, L)

        # Deferred output projection: ONE matmul + one bulk store for the whole
        # sequence instead of T per-step matmuls and narrow stores.
        y_ref[...] = jnp.dot(hseq_ref[...].astype(mxu_dt), wout_ref[...],
                             preferred_element_type=jnp.float32)

    return kernel


# -----------------------------------------------------------------------------
# Parameter construction (deterministic, PyTorch-style uniform(-1/sqrt(H), 1/sqrt(H)))
# -----------------------------------------------------------------------------
def init_recurrent_block_params(key, c_in, c_out, hid_size, n_layers, use_bias=True):
    k = 1.0 / jnp.sqrt(hid_size)
    params = []
    for layer in range(n_layers):
        d_in = c_in if layer == 0 else c_out
        key, k1, k2, k3, k4, k5 = jax.random.split(key, 6)
        w_ih = jax.random.uniform(k1, (d_in, 4 * hid_size), jnp.float32, -k, k)
        w_hh = jax.random.uniform(k2, (c_out, 4 * hid_size), jnp.float32, -k, k)
        w_hr = jax.random.uniform(k3, (hid_size, c_out), jnp.float32, -k, k)
        if use_bias:
            b_ih = jax.random.uniform(k4, (4 * hid_size,), jnp.float32, -k, k)
            b_hh = jax.random.uniform(k5, (4 * hid_size,), jnp.float32, -k, k)
            b = (b_ih + b_hh)[None, :]
        else:
            b = jnp.zeros((1, 4 * hid_size), jnp.float32)
        params.append((w_ih, w_hh, w_hr, b))
    return params


# -----------------------------------------------------------------------------
# RecurrentBlock forward
# -----------------------------------------------------------------------------
def recurrent_block_forward(x, params, mxu_dtype=jnp.float32):
    """x: [B, C, T, 2] -> [B, T, c_out] (matches the PyTorch module).

    mxu_dtype: dtype fed to the MXU (jnp.float32 keeps the math bit-close to the
    PyTorch-semantics reference; jnp.bfloat16 cuts MXU latency ~3x on v6e/v7x —
    accumulation, gate math and the h/c state always stay f32).
    """
    B, C, T, two = x.shape
    assert two == 2
    L = len(params)
    H, P = params[0][2].shape          # w_hr: (hid_size, c_out)
    Din = 2 * C
    BP = ((B + 7) // 8) * 8            # pad batch to the 8-row sublane tile

    # torch.cat((x[...,0], x[...,1]), dim=1).permute(0, 2, 1), laid out TIME-major
    # (row = t*BP + b) with the batch zero-padded to BP so every per-step slab
    # the kernel touches is sublane-tile aligned.
    xin = jnp.transpose(x, (2, 0, 3, 1)).reshape(T, B, Din)
    xin = jnp.pad(xin, ((0, 0), (0, BP - B), (0, 0)))
    xin = xin.reshape(T * BP, Din).astype(mxu_dtype)

    # Weight folding (tiny matmuls, constant-folded under jit):
    #   R_l   = W_hr_l @ W_hh_l      -> recurrence carries the pre-projection hidden
    #   A_l   = W_hr_{l-1} @ W_ih_l  -> inter-layer projection fused into the input term
    #   W_out = W_hr_{L-1}           -> single deferred output projection
    inputs = [xin]
    prev_whr = None
    for (w_ih, w_hh, w_hr, bias) in params:
        A = w_ih if prev_whr is None else prev_whr @ w_ih
        R = w_hr @ w_hh
        inputs += [A.astype(mxu_dtype), R.astype(mxu_dtype),
                   bias.astype(jnp.float32)]
        prev_whr = w_hr
    inputs.append(prev_whr.astype(mxu_dtype))            # W_out

    scratch_bytes = 4 * (T * BP * 4 * H + T * BP * H)
    io_bytes = sum(int(a.size) * a.dtype.itemsize for a in inputs) + 4 * T * BP * P
    # Explicit scoped-VMEM budget; capped at 48 MiB so it leaves headroom on
    # v7x's 64 MiB physical VMEM (time-chunk the sequence when this ever trips
    # at production T; at these sizes the footprint is tiny).
    vmem_limit = int(min(48 * 1024 * 1024,
                         max(16 * 1024 * 1024, 2 * (scratch_bytes + io_bytes))))

    kernel = make_fused_lstm_kernel(L, T, BP, H)
    y_flat = pl.pallas_call(
        kernel,
        out_shape=jax.ShapeDtypeStruct((T * BP, P), jnp.float32),
        in_specs=[pl.BlockSpec(memory_space=pltpu.MemorySpace.VMEM)] * len(inputs),
        out_specs=pl.BlockSpec(memory_space=pltpu.MemorySpace.VMEM),
        scratch_shapes=[pltpu.VMEM((T * BP, 4 * H), jnp.float32),   # layer-0 input proj
                        pltpu.VMEM((T * BP, H), jnp.float32)],      # last-layer hidden seq
        compiler_params=pltpu.CompilerParams(vmem_limit_bytes=vmem_limit),
    )(*inputs)

    # (T*BP, P) time-major, batch-padded -> (B, T, P) batch-first.
    return jnp.transpose(y_flat.reshape(T, BP, P)[:, :B, :], (1, 0, 2))


# -----------------------------------------------------------------------------
# Pure-JAX reference (unfolded, PyTorch proj_size LSTM semantics) for validation
# -----------------------------------------------------------------------------
def lstm_layer_ref(x, w_ih, w_hh, w_hr, b):
    B, T, _ = x.shape
    H, P = w_hr.shape

    def step(carry, xt):
        h, c = carry
        gates = xt @ w_ih + h @ w_hh + b[0]
        i, f, g, o = jnp.split(gates, 4, axis=-1)
        i = jax.nn.sigmoid(i); f = jax.nn.sigmoid(f)
        g = jnp.tanh(g); o = jax.nn.sigmoid(o)
        c = f * c + i * g
        h = (o * jnp.tanh(c)) @ w_hr
        return (h, c), h

    (_, _), ys = lax.scan(step,
                          (jnp.zeros((B, P), jnp.float32),
                           jnp.zeros((B, H), jnp.float32)),
                          jnp.transpose(x, (1, 0, 2)))
    return jnp.transpose(ys, (1, 0, 2))


def recurrent_block_ref(x, params):
    xin = jnp.concatenate([x[..., 0], x[..., 1]], axis=1)
    h = jnp.transpose(xin, (0, 2, 1)).astype(jnp.float32)
    for (w_ih, w_hh, w_hr, b) in params:
        h = lstm_layer_ref(h, w_ih, w_hh, w_hr, b)
    return h


if __name__ == "__main__":
    # Raw input [B, C, T, 2]; the module's cat over the last axis gives c_in = 2*C.
    B, C, T = 2, 4, 8
    c_in, c_out, hid_size, n_layers = 2 * C, 4, 32, 3

    key = jax.random.PRNGKey(0)
    key, kx = jax.random.split(key)
    x = jax.random.normal(kx, (B, C, T, 2), jnp.float32)

    params = init_recurrent_block_params(key, c_in, c_out, hid_size, n_layers)
    ref = recurrent_block_ref(x, params)

    # f32 MXU path: bit-close to the PyTorch-semantics reference.
    fwd_f32 = jax.jit(lambda xx: recurrent_block_forward(xx, params, jnp.float32))
    out_f32 = jax.block_until_ready(fwd_f32(x))
    assert out_f32.shape == (B, T, c_out), out_f32.shape
    err_f32 = float(jnp.max(jnp.abs(out_f32 - ref)))
    assert jnp.allclose(out_f32, ref, atol=1e-4, rtol=1e-4), err_f32

    # bf16-MXU path (perf feedback item 4): f32 accumulation; looser tolerance
    # because bf16 operand rounding compounds through the recurrence.
    fwd_bf16 = jax.jit(lambda xx: recurrent_block_forward(xx, params, jnp.bfloat16))
    out_bf16 = jax.block_until_ready(fwd_bf16(x))
    err_bf16 = float(jnp.max(jnp.abs(out_bf16 - ref)))
    assert jnp.allclose(out_bf16, ref, atol=1e-1, rtol=1e-1), err_bf16

    print("KERNEL_OK")
</pallas_src>

<mosaic_0001>
module attributes {stable_mosaic.version = 11 : i64} {
  func.func @kernel(%arg0: memref<64x8xf32, #tpu.memory_space<vmem>>, %arg1: memref<8x128xf32, #tpu.memory_space<vmem>>, %arg2: memref<32x128xf32, #tpu.memory_space<vmem>>, %arg3: memref<1x128xf32, #tpu.memory_space<vmem>>, %arg4: memref<32x128xf32, #tpu.memory_space<vmem>>, %arg5: memref<32x128xf32, #tpu.memory_space<vmem>>, %arg6: memref<1x128xf32, #tpu.memory_space<vmem>>, %arg7: memref<32x128xf32, #tpu.memory_space<vmem>>, %arg8: memref<32x128xf32, #tpu.memory_space<vmem>>, %arg9: memref<1x128xf32, #tpu.memory_space<vmem>>, %arg10: memref<32x4xf32, #tpu.memory_space<vmem>>, %arg11: memref<64x4xf32, #tpu.memory_space<vmem>>, %arg12: memref<64x128xf32, #tpu.memory_space<vmem>>, %arg13: memref<64x32xf32, #tpu.memory_space<vmem>>) attributes {dimension_semantics = [], scalar_prefetch = 0 : i64, scratch_operands = 2 : i64, tpu.core_type = #tpu.core_type<tc>} {
    %c0 = arith.constant 0 : index
    %c0_0 = arith.constant 0 : index
    %0 = vector.load %arg1[%c0, %c0_0] : memref<8x128xf32, #tpu.memory_space<vmem>>, vector<8x128xf32>
    %c0_1 = arith.constant 0 : index
    %c0_2 = arith.constant 0 : index
    %1 = vector.load %arg4[%c0_1, %c0_2] : memref<32x128xf32, #tpu.memory_space<vmem>>, vector<32x128xf32>
    %c0_3 = arith.constant 0 : index
    %c0_4 = arith.constant 0 : index
    %2 = vector.load %arg7[%c0_3, %c0_4] : memref<32x128xf32, #tpu.memory_space<vmem>>, vector<32x128xf32>
    %c0_5 = arith.constant 0 : index
    %c0_6 = arith.constant 0 : index
    %3 = vector.load %arg2[%c0_5, %c0_6] : memref<32x128xf32, #tpu.memory_space<vmem>>, vector<32x128xf32>
    %c0_7 = arith.constant 0 : index
    %c0_8 = arith.constant 0 : index
    %4 = vector.load %arg5[%c0_7, %c0_8] : memref<32x128xf32, #tpu.memory_space<vmem>>, vector<32x128xf32>
    %c0_9 = arith.constant 0 : index
    %c0_10 = arith.constant 0 : index
    %5 = vector.load %arg8[%c0_9, %c0_10] : memref<32x128xf32, #tpu.memory_space<vmem>>, vector<32x128xf32>
    %c0_11 = arith.constant 0 : index
    %c0_12 = arith.constant 0 : index
    %6 = vector.load %arg3[%c0_11, %c0_12] : memref<1x128xf32, #tpu.memory_space<vmem>>, vector<1x128xf32>
    %c0_13 = arith.constant 0 : index
    %c0_14 = arith.constant 0 : index
    %7 = vector.load %arg6[%c0_13, %c0_14] : memref<1x128xf32, #tpu.memory_space<vmem>>, vector<1x128xf32>
    %c0_15 = arith.constant 0 : index
    %c0_16 = arith.constant 0 : index
    %8 = vector.load %arg9[%c0_15, %c0_16] : memref<1x128xf32, #tpu.memory_space<vmem>>, vector<1x128xf32>
    %9 = vector.shape_cast %7 : vector<1x128xf32> to vector<1x128xf32>
    %10 = vector.broadcast %9 : vector<1x128xf32> to vector<8x128xf32>
    %11 = vector.shape_cast %8 : vector<1x128xf32> to vector<1x128xf32>
    %12 = vector.broadcast %11 : vector<1x128xf32> to vector<8x128xf32>
    %c0_17 = arith.constant 0 : index
    %c0_18 = arith.constant 0 : index
    %13 = vector.load %arg0[%c0_17, %c0_18] : memref<64x8xf32, #tpu.memory_space<vmem>>, vector<64x8xf32>
    %cst = arith.constant dense<0.000000e+00> : vector<64x128xf32>
    %14 = tpu.matmul %13, %0, %cst {dimension_numbers = #tpu.dot_dimension_numbers<[1], [0], [0], [1], [0, 0, 1, 1], [], []>} : vector<64x8xf32>, vector<8x128xf32>, vector<64x128xf32> -> vector<64x128xf32>
    %15 = vector.broadcast %6 : vector<1x128xf32> to vector<64x128xf32>
    %16 = arith.addf %14, %15 : vector<64x128xf32>
    %c0_19 = arith.constant 0 : index
    %c0_20 = arith.constant 0 : index
    %17 = vector.load %arg12[%c0_19, %c0_20] : memref<64x128xf32, #tpu.memory_space<vmem>>, vector<64x128xf32>
    tpu.vector_store %arg12[%c0_19, %c0_20], %16 {strides = array<i32>} : memref<64x128xf32, #tpu.memory_space<vmem>>, vector<64x128xf32>,
    %cst_21 = arith.constant 0.000000e+00 : f32
    %18 = vector.broadcast %cst_21 : f32 to vector<8x32xf32>
    %c0_22 = arith.constant 0 : index
    %c0_23 = arith.constant 0 : index
    %19 = vector.load %arg12[%c0_22, %c0_23] : memref<64x128xf32, #tpu.memory_space<vmem>>, vector<8x128xf32>
    %cst_24 = arith.constant dense<0.000000e+00> : vector<8x128xf32>
    %20 = tpu.matmul %18, %3, %cst_24 {dimension_numbers = #tpu.dot_dimension_numbers<[1], [0], [0], [1], [0, 0, 1, 1], [], []>} : vector<8x32xf32>, vector<32x128xf32>, vector<8x128xf32> -> vector<8x128xf32>
    %21 = arith.addf %19, %20 : vector<8x128xf32>
    %22 = arith.negf %21 : vector<8x128xf32>
    %23 = math.exp %22 : vector<8x128xf32>
    %cst_25 = arith.constant 1.000000e+00 : f32
    %24 = vector.broadcast %cst_25 : f32 to vector<8x128xf32>
    %25 = arith.addf %24, %23 : vector<8x128xf32>
    %26 = arith.divf %24, %25 : vector<8x128xf32>
    %27 = math.tanh %21 : vector<8x128xf32>
    %c64_i32 = arith.constant 64 : i32
    %28 = tpu.dynamic_rotate %27 by %c64_i32 dim 1 : vector<8x128xf32>, i32 -> vector<8x128xf32>
    %29 = arith.mulf %26, %28 : vector<8x128xf32>
    %30 = vector.extract_strided_slice %29 {offsets = [0, 0], sizes = [8, 32], strides = [1, 1]} : vector<8x128xf32> to vector<8x32xf32>
    %31 = vector.extract_strided_slice %26 {offsets = [0, 32], sizes = [8, 32], strides = [1, 1]} : vector<8x128xf32> to vector<8x32xf32>
    %32 = vector.extract_strided_slice %26 {offsets = [0, 96], sizes = [8, 32], strides = [1, 1]} : vector<8x128xf32> to vector<8x32xf32>
    %33 = arith.mulf %31, %18 : vector<8x32xf32>
    %34 = arith.addf %33, %30 : vector<8x32xf32>
    %35 = math.tanh %34 : vector<8x32xf32>
    %36 = arith.mulf %32, %35 : vector<8x32xf32>
    %c8 = arith.constant 8 : index
    %c0_26 = arith.constant 0 : index
    %37 = vector.load %arg12[%c8, %c0_26] : memref<64x128xf32, #tpu.memory_space<vmem>>, vector<8x128xf32>
    %cst_27 = arith.constant dense<0.000000e+00> : vector<8x128xf32>
    %38 = tpu.matmul %36, %3, %cst_27 {dimension_numbers = #tpu.dot_dimension_numbers<[1], [0], [0], [1], [0, 0, 1, 1], [], []>} : vector<8x32xf32>, vector<32x128xf32>, vector<8x128xf32> -> vector<8x128xf32>
    %39 = arith.addf %37, %38 : vector<8x128xf32>
    %40 = arith.negf %39 : vector<8x128xf32>
    %41 = math.exp %40 : vector<8x128xf32>
    %cst_28 = arith.constant 1.000000e+00 : f32
    %42 = vector.broadcast %cst_28 : f32 to vector<8x128xf32>
    %43 = arith.addf %42, %41 : vector<8x128xf32>
    %44 = arith.divf %42, %43 : vector<8x128xf32>
    %45 = math.tanh %39 : vector<8x128xf32>
    %c64_i32_29 = arith.constant 64 : i32
    %46 = tpu.dynamic_rotate %45 by %c64_i32_29 dim 1 : vector<8x128xf32>, i32 -> vector<8x128xf32>
    %47 = arith.mulf %44, %46 : vector<8x128xf32>
    %48 = vector.extract_strided_slice %47 {offsets = [0, 0], sizes = [8, 32], strides = [1, 1]} : vector<8x128xf32> to vector<8x32xf32>
    %49 = vector.extract_strided_slice %44 {offsets = [0, 32], sizes = [8, 32], strides = [1, 1]} : vector<8x128xf32> to vector<8x32xf32>
    %50 = vector.extract_strided_slice %44 {offsets = [0, 96], sizes = [8, 32], strides = [1, 1]} : vector<8x128xf32> to vector<8x32xf32>
    %51 = arith.mulf %49, %34 : vector<8x32xf32>
    %52 = arith.addf %51, %48 : vector<8x32xf32>
    %53 = math.tanh %52 : vector<8x32xf32>
    %54 = arith.mulf %50, %53 : vector<8x32xf32>
    %cst_30 = arith.constant dense<0.000000e+00> : vector<8x128xf32>
    %55 = tpu.matmul %36, %1, %cst_30 {dimension_numbers = #tpu.dot_dimension_numbers<[1], [0], [0], [1], [0, 0, 1, 1], [], []>} : vector<8x32xf32>, vector<32x128xf32>, vector<8x128xf32> -> vector<8x128xf32>
    %56 = arith.addf %55, %10 : vector<8x128xf32>
    %cst_31 = arith.constant dense<0.000000e+00> : vector<8x128xf32>
    %57 = tpu.matmul %18, %4, %cst_31 {dimension_numbers = #tpu.dot_dimension_numbers<[1], [0], [0], [1], [0, 0, 1, 1], [], []>} : vector<8x32xf32>, vector<32x128xf32>, vector<8x128xf32> -> vector<8x128xf32>
    %58 = arith.addf %56, %57 : vector<8x128xf32>
    %59 = arith.negf %58 : vector<8x128xf32>
    %60 = math.exp %59 : vector<8x128xf32>
    %cst_32 = arith.constant 1.000000e+00 : f32
    %61 = vector.broadcast %cst_32 : f32 to vector<8x128xf32>
    %62 = arith.addf %61, %60 : vector<8x128xf32>
    %63 = arith.divf %61, %62 : vector<8x128xf32>
    %64 = math.tanh %58 : vector<8x128xf32>
    %c64_i32_33 = arith.constant 64 : i32
    %65 = tpu.dynamic_rotate %64 by %c64_i32_33 dim 1 : vector<8x128xf32>, i32 -> vector<8x128xf32>
    %66 = arith.mulf %63, %65 : vector<8x128xf32>
    %67 = vector.extract_strided_slice %66 {offsets = [0, 0], sizes = [8, 32], strides = [1, 1]} : vector<8x128xf32> to vector<8x32xf32>
    %68 = vector.extract_strided_slice %63 {offsets = [0, 32], sizes = [8, 32], strides = [1, 1]} : vector<8x128xf32> to vector<8x32xf32>
    %69 = vector.extract_strided_slice %63 {offsets = [0, 96], sizes = [8, 32], strides = [1, 1]} : vector<8x128xf32> to vector<8x32xf32>
    %70 = arith.mulf %68, %18 : vector<8x32xf32>
    %71 = arith.addf %70, %67 : vector<8x32xf32>
    %72 = math.tanh %71 : vector<8x32xf32>
    %73 = arith.mulf %69, %72 : vector<8x32xf32>
    %c16 = arith.constant 16 : index
    %c0_34 = arith.constant 0 : index
    %74 = vector.load %arg12[%c16, %c0_34] : memref<64x128xf32, #tpu.memory_space<vmem>>, vector<8x128xf32>
    %cst_35 = arith.constant dense<0.000000e+00> : vector<8x128xf32>
    %75 = tpu.matmul %54, %3, %cst_35 {dimension_numbers = #tpu.dot_dimension_numbers<[1], [0], [0], [1], [0, 0, 1, 1], [], []>} : vector<8x32xf32>, vector<32x128xf32>, vector<8x128xf32> -> vector<8x128xf32>
    %76 = arith.addf %74, %75 : vector<8x128xf32>
    %77 = arith.negf %76 : vector<8x128xf32>
    %78 = math.exp %77 : vector<8x128xf32>
    %cst_36 = arith.constant 1.000000e+00 : f32
    %79 = vector.broadcast %cst_36 : f32 to vector<8x128xf32>
    %80 = arith.addf %79, %78 : vector<8x128xf32>
    %81 = arith.divf %79, %80 : vector<8x128xf32>
    %82 = math.tanh %76 : vector<8x128xf32>
    %c64_i32_37 = arith.constant 64 : i32
    %83 = tpu.dynamic_rotate %82 by %c64_i32_37 dim 1 : vector<8x128xf32>, i32 -> vector<8x128xf32>
    %84 = arith.mulf %81, %83 : vector<8x128xf32>
    %85 = vector.extract_strided_slice %84 {offsets = [0, 0], sizes = [8, 32], strides = [1, 1]} : vector<8x128xf32> to vector<8x32xf32>
    %86 = vector.extract_strided_slice %81 {offsets = [0, 32], sizes = [8, 32], strides = [1, 1]} : vector<8x128xf32> to vector<8x32xf32>
    %87 = vector.extract_strided_slice %81 {offsets = [0, 96], sizes = [8, 32], strides = [1, 1]} : vector<8x128xf32> to vector<8x32xf32>
    %88 = arith.mulf %86, %52 : vector<8x32xf32>
    %89 = arith.addf %88, %85 : vector<8x32xf32>
    %90 = math.tanh %89 : vector<8x32xf32>
    %91 = arith.mulf %87, %90 : vector<8x32xf32>
    %cst_38 = arith.constant dense<0.000000e+00> : vector<8x128xf32>
    %92 = tpu.matmul %54, %1, %cst_38 {dimension_numbers = #tpu.dot_dimension_numbers<[1], [0], [0], [1], [0, 0, 1, 1], [], []>} : vector<8x32xf32>, vector<32x128xf32>, vector<8x128xf32> -> vector<8x128xf32>
    %93 = arith.addf %92, %10 : vector<8x128xf32>
    %cst_39 = arith.constant dense<0.000000e+00> : vector<8x128xf32>
    %94 = tpu.matmul %73, %4, %cst_39 {dimension_numbers = #tpu.dot_dimension_numbers<[1], [0], [0], [1], [0, 0, 1, 1], [], []>} : vector<8x32xf32>, vector<32x128xf32>, vector<8x128xf32> -> vector<8x128xf32>
    %95 = arith.addf %93, %94 : vector<8x128xf32>
    %96 = arith.negf %95 : vector<8x128xf32>
    %97 = math.exp %96 : vector<8x128xf32>
    %cst_40 = arith.constant 1.000000e+00 : f32
    %98 = vector.broadcast %cst_40 : f32 to vector<8x128xf32>
    %99 = arith.addf %98, %97 : vector<8x128xf32>
    %100 = arith.divf %98, %99 : vector<8x128xf32>
    %101 = math.tanh %95 : vector<8x128xf32>
    %c64_i32_41 = arith.constant 64 : i32
    %102 = tpu.dynamic_rotate %101 by %c64_i32_41 dim 1 : vector<8x128xf32>, i32 -> vector<8x128xf32>
    %103 = arith.mulf %100, %102 : vector<8x128xf32>
    %104 = vector.extract_strided_slice %103 {offsets = [0, 0], sizes = [8, 32], strides = [1, 1]} : vector<8x128xf32> to vector<8x32xf32>
    %105 = vector.extract_strided_slice %100 {offsets = [0, 32], sizes = [8, 32], strides = [1, 1]} : vector<8x128xf32> to vector<8x32xf32>
    %106 = vector.extract_strided_slice %100 {offsets = [0, 96], sizes = [8, 32], strides = [1, 1]} : vector<8x128xf32> to vector<8x32xf32>
    %107 = arith.mulf %105, %71 : vector<8x32xf32>
    %108 = arith.addf %107, %104 : vector<8x32xf32>
    %109 = math.tanh %108 : vector<8x32xf32>
    %110 = arith.mulf %106, %109 : vector<8x32xf32>
    %cst_42 = arith.constant dense<0.000000e+00> : vector<8x128xf32>
    %111 = tpu.matmul %73, %2, %cst_42 {dimension_numbers = #tpu.dot_dimension_numbers<[1], [0], [0], [1], [0, 0, 1, 1], [], []>} : vector<8x32xf32>, vector<32x128xf32>, vector<8x128xf32> -> vector<8x128xf32>
    %112 = arith.addf %111, %12 : vector<8x128xf32>
    %cst_43 = arith.constant dense<0.000000e+00> : vector<8x128xf32>
    %113 = tpu.matmul %18, %5, %cst_43 {dimension_numbers = #tpu.dot_dimension_numbers<[1], [0], [0], [1], [0, 0, 1, 1], [], []>} : vector<8x32xf32>, vector<32x128xf32>, vector<8x128xf32> -> vector<8x128xf32>
    %114 = arith.addf %112, %113 : vector<8x128xf32>
    %115 = arith.negf %114 : vector<8x128xf32>
    %116 = math.exp %115 : vector<8x128xf32>
    %cst_44 = arith.constant 1.000000e+00 : f32
    %117 = vector.broadcast %cst_44 : f32 to vector<8x128xf32>
    %118 = arith.addf %117, %116 : vector<8x128xf32>
    %119 = arith.divf %117, %118 : vector<8x128xf32>
    %120 = math.tanh %114 : vector<8x128xf32>
    %c64_i32_45 = arith.constant 64 : i32
    %121 = tpu.dynamic_rotate %120 by %c64_i32_45 dim 1 : vector<8x128xf32>, i32 -> vector<8x128xf32>
    %122 = arith.mulf %119, %121 : vector<8x128xf32>
    %123 = vector.extract_strided_slice %122 {offsets = [0, 0], sizes = [8, 32], strides = [1, 1]} : vector<8x128xf32> to vector<8x32xf32>
    %124 = vector.extract_strided_slice %119 {offsets = [0, 32], sizes = [8, 32], strides = [1, 1]} : vector<8x128xf32> to vector<8x32xf32>
    %125 = vector.extract_strided_slice %119 {offsets = [0, 96], sizes = [8, 32], strides = [1, 1]} : vector<8x128xf32> to vector<8x32xf32>
    %126 = arith.mulf %124, %18 : vector<8x32xf32>
    %127 = arith.addf %126, %123 : vector<8x32xf32>
    %128 = math.tanh %127 : vector<8x32xf32>
    %129 = arith.mulf %125, %128 : vector<8x32xf32>
    %c0_46 = arith.constant 0 : index
    %c0_47 = arith.constant 0 : index
    %130 = vector.load %arg13[%c0_46, %c0_47] : memref<64x32xf32, #tpu.memory_space<vmem>>, vector<8x32xf32>
    tpu.vector_store %arg13[%c0_46, %c0_47], %129 {strides = array<i32>} : memref<64x32xf32, #tpu.memory_space<vmem>>, vector<8x32xf32>,
    %c24 = arith.constant 24 : index
    %c0_48 = arith.constant 0 : index
    %131 = vector.load %arg12[%c24, %c0_48] : memref<64x128xf32, #tpu.memory_space<vmem>>, vector<8x128xf32>
    %cst_49 = arith.constant dense<0.000000e+00> : vector<8x128xf32>
    %132 = tpu.matmul %91, %3, %cst_49 {dimension_numbers = #tpu.dot_dimension_numbers<[1], [0], [0], [1], [0, 0, 1, 1], [], []>} : vector<8x32xf32>, vector<32x128xf32>, vector<8x128xf32> -> vector<8x128xf32>
    %133 = arith.addf %131, %132 : vector<8x128xf32>
    %134 = arith.negf %133 : vector<8x128xf32>
    %135 = math.exp %134 : vector<8x128xf32>
    %cst_50 = arith.constant 1.000000e+00 : f32
    %136 = vector.broadcast %cst_50 : f32 to vector<8x128xf32>
    %137 = arith.addf %136, %135 : vector<8x128xf32>
    %138 = arith.divf %136, %137 : vector<8x128xf32>
    %139 = math.tanh %133 : vector<8x128xf32>
    %c64_i32_51 = arith.constant 64 : i32
    %140 = tpu.dynamic_rotate %139 by %c64_i32_51 dim 1 : vector<8x128xf32>, i32 -> vector<8x128xf32>
    %141 = arith.mulf %138, %140 : vector<8x128xf32>
    %142 = vector.extract_strided_slice %141 {offsets = [0, 0], sizes = [8, 32], strides = [1, 1]} : vector<8x128xf32> to vector<8x32xf32>
    %143 = vector.extract_strided_slice %138 {offsets = [0, 32], sizes = [8, 32], strides = [1, 1]} : vector<8x128xf32> to vector<8x32xf32>
    %144 = vector.extract_strided_slice %138 {offsets = [0, 96], sizes = [8, 32], strides = [1, 1]} : vector<8x128xf32> to vector<8x32xf32>
    %145 = arith.mulf %143, %89 : vector<8x32xf32>
    %146 = arith.addf %145, %142 : vector<8x32xf32>
    %147 = math.tanh %146 : vector<8x32xf32>
    %148 = arith.mulf %144, %147 : vector<8x32xf32>
    %cst_52 = arith.constant dense<0.000000e+00> : vector<8x128xf32>
    %149 = tpu.matmul %91, %1, %cst_52 {dimension_numbers = #tpu.dot_dimension_numbers<[1], [0], [0], [1], [0, 0, 1, 1], [], []>} : vector<8x32xf32>, vector<32x128xf32>, vector<8x128xf32> -> vector<8x128xf32>
    %150 = arith.addf %149, %10 : vector<8x128xf32>
    %cst_53 = arith.constant dense<0.000000e+00> : vector<8x128xf32>
    %151 = tpu.matmul %110, %4, %cst_53 {dimension_numbers = #tpu.dot_dimension_numbers<[1], [0], [0], [1], [0, 0, 1, 1], [], []>} : vector<8x32xf32>, vector<32x128xf32>, vector<8x128xf32> -> vector<8x128xf32>
    %152 = arith.addf %150, %151 : vector<8x128xf32>
    %153 = arith.negf %152 : vector<8x128xf32>
    %154 = math.exp %153 : vector<8x128xf32>
    %cst_54 = arith.constant 1.000000e+00 : f32
    %155 = vector.broadcast %cst_54 : f32 to vector<8x128xf32>
    %156 = arith.addf %155, %154 : vector<8x128xf32>
    %157 = arith.divf %155, %156 : vector<8x128xf32>
    %158 = math.tanh %152 : vector<8x128xf32>
    %c64_i32_55 = arith.constant 64 : i32
    %159 = tpu.dynamic_rotate %158 by %c64_i32_55 dim 1 : vector<8x128xf32>, i32 -> vector<8x128xf32>
    %160 = arith.mulf %157, %159 : vector<8x128xf32>
    %161 = vector.extract_strided_slice %160 {offsets = [0, 0], sizes = [8, 32], strides = [1, 1]} : vector<8x128xf32> to vector<8x32xf32>
    %162 = vector.extract_strided_slice %157 {offsets = [0, 32], sizes = [8, 32], strides = [1, 1]} : vector<8x128xf32> to vector<8x32xf32>
    %163 = vector.extract_strided_slice %157 {offsets = [0, 96], sizes = [8, 32], strides = [1, 1]} : vector<8x128xf32> to vector<8x32xf32>
    %164 = arith.mulf %162, %108 : vector<8x32xf32>
    %165 = arith.addf %164, %161 : vector<8x32xf32>
    %166 = math.tanh %165 : vector<8x32xf32>
    %167 = arith.mulf %163, %166 : vector<8x32xf32>
    %cst_56 = arith.constant dense<0.000000e+00> : vector<8x128xf32>
    %168 = tpu.matmul %110, %2, %cst_56 {dimension_numbers = #tpu.dot_dimension_numbers<[1], [0], [0], [1], [0, 0, 1, 1], [], []>} : vector<8x32xf32>, vector<32x128xf32>, vector<8x128xf32> -> vector<8x128xf32>
    %169 = arith.addf %168, %12 : vector<8x128xf32>
    %cst_57 = arith.constant dense<0.000000e+00> : vector<8x128xf32>
    %170 = tpu.matmul %129, %5, %cst_57 {dimension_numbers = #tpu.dot_dimension_numbers<[1], [0], [0], [1], [0, 0, 1, 1], [], []>} : vector<8x32xf32>, vector<32x128xf32>, vector<8x128xf32> -> vector<8x128xf32>
    %171 = arith.addf %169, %170 : vector<8x128xf32>
    %172 = arith.negf %171 : vector<8x128xf32>
    %173 = math.exp %172 : vector<8x128xf32>
    %cst_58 = arith.constant 1.000000e+00 : f32
    %174 = vector.broadcast %cst_58 : f32 to vector<8x128xf32>
    %175 = arith.addf %174, %173 : vector<8x128xf32>
    %176 = arith.divf %174, %175 : vector<8x128xf32>
    %177 = math.tanh %171 : vector<8x128xf32>
    %c64_i32_59 = arith.constant 64 : i32
    %178 = tpu.dynamic_rotate %177 by %c64_i32_59 dim 1 : vector<8x128xf32>, i32 -> vector<8x128xf32>
    %179 = arith.mulf %176, %178 : vector<8x128xf32>
    %180 = vector.extract_strided_slice %179 {offsets = [0, 0], sizes = [8, 32], strides = [1, 1]} : vector<8x128xf32> to vector<8x32xf32>
    %181 = vector.extract_strided_slice %176 {offsets = [0, 32], sizes = [8, 32], strides = [1, 1]} : vector<8x128xf32> to vector<8x32xf32>
    %182 = vector.extract_strided_slice %176 {offsets = [0, 96], sizes = [8, 32], strides = [1, 1]} : vector<8x128xf32> to vector<8x32xf32>
    %183 = arith.mulf %181, %127 : vector<8x32xf32>
    %184 = arith.addf %183, %180 : vector<8x32xf32>
    %185 = math.tanh %184 : vector<8x32xf32>
    %186 = arith.mulf %182, %185 : vector<8x32xf32>
    %c8_60 = arith.constant 8 : index
    %c0_61 = arith.constant 0 : index
    %187 = vector.load %arg13[%c8_60, %c0_61] : memref<64x32xf32, #tpu.memory_space<vmem>>, vector<8x32xf32>
    tpu.vector_store %arg13[%c8_60, %c0_61], %186 {strides = array<i32>} : memref<64x32xf32, #tpu.memory_space<vmem>>, vector<8x32xf32>,
    %c32 = arith.constant 32 : index
    %c0_62 = arith.constant 0 : index
    %188 = vector.load %arg12[%c32, %c0_62] : memref<64x128xf32, #tpu.memory_space<vmem>>, vector<8x128xf32>
    %cst_63 = arith.constant dense<0.000000e+00> : vector<8x128xf32>
    %189 = tpu.matmul %148, %3, %cst_63 {dimension_numbers = #tpu.dot_dimension_numbers<[1], [0], [0], [1], [0, 0, 1, 1], [], []>} : vector<8x32xf32>, vector<32x128xf32>, vector<8x128xf32> -> vector<8x128xf32>
    %190 = arith.addf %188, %189 : vector<8x128xf32>
    %191 = arith.negf %190 : vector<8x128xf32>
    %192 = math.exp %191 : vector<8x128xf32>
    %cst_64 = arith.constant 1.000000e+00 : f32
    %193 = vector.broadcast %cst_64 : f32 to vector<8x128xf32>
    %194 = arith.addf %193, %192 : vector<8x128xf32>
    %195 = arith.divf %193, %194 : vector<8x128xf32>
    %196 = math.tanh %190 : vector<8x128xf32>
    %c64_i32_65 = arith.constant 64 : i32
    %197 = tpu.dynamic_rotate %196 by %c64_i32_65 dim 1 : vector<8x128xf32>, i32 -> vector<8x128xf32>
    %198 = arith.mulf %195, %197 : vector<8x128xf32>
    %199 = vector.extract_strided_slice %198 {offsets = [0, 0], sizes = [8, 32], strides = [1, 1]} : vector<8x128xf32> to vector<8x32xf32>
    %200 = vector.extract_strided_slice %195 {offsets = [0, 32], sizes = [8, 32], strides = [1, 1]} : vector<8x128xf32> to vector<8x32xf32>
    %201 = vector.extract_strided_slice %195 {offsets = [0, 96], sizes = [8, 32], strides = [1, 1]} : vector<8x128xf32> to vector<8x32xf32>
    %202 = arith.mulf %200, %146 : vector<8x32xf32>
    %203 = arith.addf %202, %199 : vector<8x32xf32>
    %204 = math.tanh %203 : vector<8x32xf32>
    %205 = arith.mulf %201, %204 : vector<8x32xf32>
    %cst_66 = arith.constant dense<0.000000e+00> : vector<8x128xf32>
    %206 = tpu.matmul %148, %1, %cst_66 {dimension_numbers = #tpu.dot_dimension_numbers<[1], [0], [0], [1], [0, 0, 1, 1], [], []>} : vector<8x32xf32>, vector<32x128xf32>, vector<8x128xf32> -> vector<8x128xf32>
    %207 = arith.addf %206, %10 : vector<8x128xf32>
    %cst_67 = arith.constant dense<0.000000e+00> : vector<8x128xf32>
    %208 = tpu.matmul %167, %4, %cst_67 {dimension_numbers = #tpu.dot_dimension_numbers<[1], [0], [0], [1], [0, 0, 1, 1], [], []>} : vector<8x32xf32>, vector<32x128xf32>, vector<8x128xf32> -> vector<8x128xf32>
    %209 = arith.addf %207, %208 : vector<8x128xf32>
    %210 = arith.negf %209 : vector<8x128xf32>
    %211 = math.exp %210 : vector<8x128xf32>
    %cst_68 = arith.constant 1.000000e+00 : f32
    %212 = vector.broadcast %cst_68 : f32 to vector<8x128xf32>
    %213 = arith.addf %212, %211 : vector<8x128xf32>
    %214 = arith.divf %212, %213 : vector<8x128xf32>
    %215 = math.tanh %209 : vector<8x128xf32>
    %c64_i32_69 = arith.constant 64 : i32
    %216 = tpu.dynamic_rotate %215 by %c64_i32_69 dim 1 : vector<8x128xf32>, i32 -> vector<8x128xf32>
    %217 = arith.mulf %214, %216 : vector<8x128xf32>
    %218 = vector.extract_strided_slice %217 {offsets = [0, 0], sizes = [8, 32], strides = [1, 1]} : vector<8x128xf32> to vector<8x32xf32>
    %219 = vector.extract_strided_slice %214 {offsets = [0, 32], sizes = [8, 32], strides = [1, 1]} : vector<8x128xf32> to vector<8x32xf32>
    %220 = vector.extract_strided_slice %214 {offsets = [0, 96], sizes = [8, 32], strides = [1, 1]} : vector<8x128xf32> to vector<8x32xf32>
    %221 = arith.mulf %219, %165 : vector<8x32xf32>
    %222 = arith.addf %221, %218 : vector<8x32xf32>
    %223 = math.tanh %222 : vector<8x32xf32>
    %224 = arith.mulf %220, %223 : vector<8x32xf32>
    %cst_70 = arith.constant dense<0.000000e+00> : vector<8x128xf32>
    %225 = tpu.matmul %167, %2, %cst_70 {dimension_numbers = #tpu.dot_dimension_numbers<[1], [0], [0], [1], [0, 0, 1, 1], [], []>} : vector<8x32xf32>, vector<32x128xf32>, vector<8x128xf32> -> vector<8x128xf32>
    %226 = arith.addf %225, %12 : vector<8x128xf32>
    %cst_71 = arith.constant dense<0.000000e+00> : vector<8x128xf32>
    %227 = tpu.matmul %186, %5, %cst_71 {dimension_numbers = #tpu.dot_dimension_numbers<[1], [0], [0], [1], [0, 0, 1, 1], [], []>} : vector<8x32xf32>, vector<32x128xf32>, vector<8x128xf32> -> vector<8x128xf32>
    %228 = arith.addf %226, %227 : vector<8x128xf32>
    %229 = arith.negf %228 : vector<8x128xf32>
    %230 = math.exp %229 : vector<8x128xf32>
    %cst_72 = arith.constant 1.000000e+00 : f32
    %231 = vector.broadcast %cst_72 : f32 to vector<8x128xf32>
    %232 = arith.addf %231, %230 : vector<8x128xf32>
    %233 = arith.divf %231, %232 : vector<8x128xf32>
    %234 = math.tanh %228 : vector<8x128xf32>
    %c64_i32_73 = arith.constant 64 : i32
    %235 = tpu.dynamic_rotate %234 by %c64_i32_73 dim 1 : vector<8x128xf32>, i32 -> vector<8x128xf32>
    %236 = arith.mulf %233, %235 : vector<8x128xf32>
    %237 = vector.extract_strided_slice %236 {offsets = [0, 0], sizes = [8, 32], strides = [1, 1]} : vector<8x128xf32> to vector<8x32xf32>
    %238 = vector.extract_strided_slice %233 {offsets = [0, 32], sizes = [8, 32], strides = [1, 1]} : vector<8x128xf32> to vector<8x32xf32>
    %239 = vector.extract_strided_slice %233 {offsets = [0, 96], sizes = [8, 32], strides = [1, 1]} : vector<8x128xf32> to vector<8x32xf32>
    %240 = arith.mulf %238, %184 : vector<8x32xf32>
    %241 = arith.addf %240, %237 : vector<8x32xf32>
    %242 = math.tanh %241 : vector<8x32xf32>
    %243 = arith.mulf %239, %242 : vector<8x32xf32>
    %c16_74 = arith.constant 16 : index
    %c0_75 = arith.constant 0 : index
    %244 = vector.load %arg13[%c16_74, %c0_75] : memref<64x32xf32, #tpu.memory_space<vmem>>, vector<8x32xf32>
    tpu.vector_store %arg13[%c16_74, %c0_75], %243 {strides = array<i32>} : memref<64x32xf32, #tpu.memory_space<vmem>>, vector<8x32xf32>,
    %c40 = arith.constant 40 : index
    %c0_76 = arith.constant 0 : index
    %245 = vector.load %arg12[%c40, %c0_76] : memref<64x128xf32, #tpu.memory_space<vmem>>, vector<8x128xf32>
    %cst_77 = arith.constant dense<0.000000e+00> : vector<8x128xf32>
    %246 = tpu.matmul %205, %3, %cst_77 {dimension_numbers = #tpu.dot_dimension_numbers<[1], [0], [0], [1], [0, 0, 1, 1], [], []>} : vector<8x32xf32>, vector<32x128xf32>, vector<8x128xf32> -> vector<8x128xf32>
    %247 = arith.addf %245, %246 : vector<8x128xf32>
    %248 = arith.negf %247 : vector<8x128xf32>
    %249 = math.exp %248 : vector<8x128xf32>
    %cst_78 = arith.constant 1.000000e+00 : f32
    %250 = vector.broadcast %cst_78 : f32 to vector<8x128xf32>
    %251 = arith.addf %250, %249 : vector<8x128xf32>
    %252 = arith.divf %250, %251 : vector<8x128xf32>
    %253 = math.tanh %247 : vector<8x128xf32>
    %c64_i32_79 = arith.constant 64 : i32
    %254 = tpu.dynamic_rotate %253 by %c64_i32_79 dim 1 : vector<8x128xf32>, i32 -> vector<8x128xf32>
    %255 = arith.mulf %252, %254 : vector<8x128xf32>
    %256 = vector.extract_strided_slice %255 {offsets = [0, 0], sizes = [8, 32], strides = [1, 1]} : vector<8x128xf32> to vector<8x32xf32>
    %257 = vector.extract_strided_slice %252 {offsets = [0, 32], sizes = [8, 32], strides = [1, 1]} : vector<8x128xf32> to vector<8x32xf32>
    %258 = vector.extract_strided_slice %252 {offsets = [0, 96], sizes = [8, 32], strides = [1, 1]} : vector<8x128xf32> to vector<8x32xf32>
    %259 = arith.mulf %257, %203 : vector<8x32xf32>
    %260 = arith.addf %259, %256 : vector<8x32xf32>
    %261 = math.tanh %260 : vector<8x32xf32>
    %262 = arith.mulf %258, %261 : vector<8x32xf32>
    %cst_80 = arith.constant dense<0.000000e+00> : vector<8x128xf32>
    %263 = tpu.matmul %205, %1, %cst_80 {dimension_numbers = #tpu.dot_dimension_numbers<[1], [0], [0], [1], [0, 0, 1, 1], [], []>} : vector<8x32xf32>, vector<32x128xf32>, vector<8x128xf32> -> vector<8x128xf32>
    %264 = arith.addf %263, %10 : vector<8x128xf32>
    %cst_81 = arith.constant dense<0.000000e+00> : vector<8x128xf32>
    %265 = tpu.matmul %224, %4, %cst_81 {dimension_numbers = #tpu.dot_dimension_numbers<[1], [0], [0], [1], [0, 0, 1, 1], [], []>} : vector<8x32xf32>, vector<32x128xf32>, vector<8x128xf32> -> vector<8x128xf32>
    %266 = arith.addf %264, %265 : vector<8x128xf32>
    %267 = arith.negf %266 : vector<8x128xf32>
    %268 = math.exp %267 : vector<8x128xf32>
    %cst_82 = arith.constant 1.000000e+00 : f32
    %269 = vector.broadcast %cst_82 : f32 to vector<8x128xf32>
    %270 = arith.addf %269, %268 : vector<8x128xf32>
    %271 = arith.divf %269, %270 : vector<8x128xf32>
    %272 = math.tanh %266 : vector<8x128xf32>
    %c64_i32_83 = arith.constant 64 : i32
    %273 = tpu.dynamic_rotate %272 by %c64_i32_83 dim 1 : vector<8x128xf32>, i32 -> vector<8x128xf32>
    %274 = arith.mulf %271, %273 : vector<8x128xf32>
    %275 = vector.extract_strided_slice %274 {offsets = [0, 0], sizes = [8, 32], strides = [1, 1]} : vector<8x128xf32> to vector<8x32xf32>
    %276 = vector.extract_strided_slice %271 {offsets = [0, 32], sizes = [8, 32], strides = [1, 1]} : vector<8x128xf32> to vector<8x32xf32>
    %277 = vector.extract_strided_slice %271 {offsets = [0, 96], sizes = [8, 32], strides = [1, 1]} : vector<8x128xf32> to vector<8x32xf32>
    %278 = arith.mulf %276, %222 : vector<8x32xf32>
    %279 = arith.addf %278, %275 : vector<8x32xf32>
    %280 = math.tanh %279 : vector<8x32xf32>
    %281 = arith.mulf %277, %280 : vector<8x32xf32>
    %cst_84 = arith.constant dense<0.000000e+00> : vector<8x128xf32>
    %282 = tpu.matmul %224, %2, %cst_84 {dimension_numbers = #tpu.dot_dimension_numbers<[1], [0], [0], [1], [0, 0, 1, 1], [], []>} : vector<8x32xf32>, vector<32x128xf32>, vector<8x128xf32> -> vector<8x128xf32>
    %283 = arith.addf %282, %12 : vector<8x128xf32>
    %cst_85 = arith.constant dense<0.000000e+00> : vector<8x128xf32>
    %284 = tpu.matmul %243, %5, %cst_85 {dimension_numbers = #tpu.dot_dimension_numbers<[1], [0], [0], [1], [0, 0, 1, 1], [], []>} : vector<8x32xf32>, vector<32x128xf32>, vector<8x128xf32> -> vector<8x128xf32>
    %285 = arith.addf %283, %284 : vector<8x128xf32>
    %286 = arith.negf %285 : vector<8x128xf32>
    %287 = math.exp %286 : vector<8x128xf32>
    %cst_86 = arith.constant 1.000000e+00 : f32
    %288 = vector.broadcast %cst_86 : f32 to vector<8x128xf32>
    %289 = arith.addf %288, %287 : vector<8x128xf32>
    %290 = arith.divf %288, %289 : vector<8x128xf32>
    %291 = math.tanh %285 : vector<8x128xf32>
    %c64_i32_87 = arith.constant 64 : i32
    %292 = tpu.dynamic_rotate %291 by %c64_i32_87 dim 1 : vector<8x128xf32>, i32 -> vector<8x128xf32>
    %293 = arith.mulf %290, %292 : vector<8x128xf32>
    %294 = vector.extract_strided_slice %293 {offsets = [0, 0], sizes = [8, 32], strides = [1, 1]} : vector<8x128xf32> to vector<8x32xf32>
    %295 = vector.extract_strided_slice %290 {offsets = [0, 32], sizes = [8, 32], strides = [1, 1]} : vector<8x128xf32> to vector<8x32xf32>
    %296 = vector.extract_strided_slice %290 {offsets = [0, 96], sizes = [8, 32], strides = [1, 1]} : vector<8x128xf32> to vector<8x32xf32>
    %297 = arith.mulf %295, %241 : vector<8x32xf32>
    %298 = arith.addf %297, %294 : vector<8x32xf32>
    %299 = math.tanh %298 : vector<8x32xf32>
    %300 = arith.mulf %296, %299 : vector<8x32xf32>
    %c24_88 = arith.constant 24 : index
    %c0_89 = arith.constant 0 : index
    %301 = vector.load %arg13[%c24_88, %c0_89] : memref<64x32xf32, #tpu.memory_space<vmem>>, vector<8x32xf32>
    tpu.vector_store %arg13[%c24_88, %c0_89], %300 {strides = array<i32>} : memref<64x32xf32, #tpu.memory_space<vmem>>, vector<8x32xf32>,
    %c48 = arith.constant 48 : index
    %c0_90 = arith.constant 0 : index
    %302 = vector.load %arg12[%c48, %c0_90] : memref<64x128xf32, #tpu.memory_space<vmem>>, vector<8x128xf32>
    %cst_91 = arith.constant dense<0.000000e+00> : vector<8x128xf32>
    %303 = tpu.matmul %262, %3, %cst_91 {dimension_numbers = #tpu.dot_dimension_numbers<[1], [0], [0], [1], [0, 0, 1, 1], [], []>} : vector<8x32xf32>, vector<32x128xf32>, vector<8x128xf32> -> vector<8x128xf32>
    %304 = arith.addf %302, %303 : vector<8x128xf32>
    %305 = arith.negf %304 : vector<8x128xf32>
    %306 = math.exp %305 : vector<8x128xf32>
    %cst_92 = arith.constant 1.000000e+00 : f32
    %307 = vector.broadcast %cst_92 : f32 to vector<8x128xf32>
    %308 = arith.addf %307, %306 : vector<8x128xf32>
    %309 = arith.divf %307, %308 : vector<8x128xf32>
    %310 = math.tanh %304 : vector<8x128xf32>
    %c64_i32_93 = arith.constant 64 : i32
    %311 = tpu.dynamic_rotate %310 by %c64_i32_93 dim 1 : vector<8x128xf32>, i32 -> vector<8x128xf32>
    %312 = arith.mulf %309, %311 : vector<8x128xf32>
    %313 = vector.extract_strided_slice %312 {offsets = [0, 0], sizes = [8, 32], strides = [1, 1]} : vector<8x128xf32> to vector<8x32xf32>
    %314 = vector.extract_strided_slice %309 {offsets = [0, 32], sizes = [8, 32], strides = [1, 1]} : vector<8x128xf32> to vector<8x32xf32>
    %315 = vector.extract_strided_slice %309 {offsets = [0, 96], sizes = [8, 32], strides = [1, 1]} : vector<8x128xf32> to vector<8x32xf32>
    %316 = arith.mulf %314, %260 : vector<8x32xf32>
    %317 = arith.addf %316, %313 : vector<8x32xf32>
    %318 = math.tanh %317 : vector<8x32xf32>
    %319 = arith.mulf %315, %318 : vector<8x32xf32>
    %cst_94 = arith.constant dense<0.000000e+00> : vector<8x128xf32>
    %320 = tpu.matmul %262, %1, %cst_94 {dimension_numbers = #tpu.dot_dimension_numbers<[1], [0], [0], [1], [0, 0, 1, 1], [], []>} : vector<8x32xf32>, vector<32x128xf32>, vector<8x128xf32> -> vector<8x128xf32>
    %321 = arith.addf %320, %10 : vector<8x128xf32>
    %cst_95 = arith.constant dense<0.000000e+00> : vector<8x128xf32>
    %322 = tpu.matmul %281, %4, %cst_95 {dimension_numbers = #tpu.dot_dimension_numbers<[1], [0], [0], [1], [0, 0, 1, 1], [], []>} : vector<8x32xf32>, vector<32x128xf32>, vector<8x128xf32> -> vector<8x128xf32>
    %323 = arith.addf %321, %322 : vector<8x128xf32>
    %324 = arith.negf %323 : vector<8x128xf32>
    %325 = math.exp %324 : vector<8x128xf32>
    %cst_96 = arith.constant 1.000000e+00 : f32
    %326 = vector.broadcast %cst_96 : f32 to vector<8x128xf32>
    %327 = arith.addf %326, %325 : vector<8x128xf32>
    %328 = arith.divf %326, %327 : vector<8x128xf32>
    %329 = math.tanh %323 : vector<8x128xf32>
    %c64_i32_97 = arith.constant 64 : i32
    %330 = tpu.dynamic_rotate %329 by %c64_i32_97 dim 1 : vector<8x128xf32>, i32 -> vector<8x128xf32>
    %331 = arith.mulf %328, %330 : vector<8x128xf32>
    %332 = vector.extract_strided_slice %331 {offsets = [0, 0], sizes = [8, 32], strides = [1, 1]} : vector<8x128xf32> to vector<8x32xf32>
    %333 = vector.extract_strided_slice %328 {offsets = [0, 32], sizes = [8, 32], strides = [1, 1]} : vector<8x128xf32> to vector<8x32xf32>
    %334 = vector.extract_strided_slice %328 {offsets = [0, 96], sizes = [8, 32], strides = [1, 1]} : vector<8x128xf32> to vector<8x32xf32>
    %335 = arith.mulf %333, %279 : vector<8x32xf32>
    %336 = arith.addf %335, %332 : vector<8x32xf32>
    %337 = math.tanh %336 : vector<8x32xf32>
    %338 = arith.mulf %334, %337 : vector<8x32xf32>
    %cst_98 = arith.constant dense<0.000000e+00> : vector<8x128xf32>
    %339 = tpu.matmul %281, %2, %cst_98 {dimension_numbers = #tpu.dot_dimension_numbers<[1], [0], [0], [1], [0, 0, 1, 1], [], []>} : vector<8x32xf32>, vector<32x128xf32>, vector<8x128xf32> -> vector<8x128xf32>
    %340 = arith.addf %339, %12 : vector<8x128xf32>
    %cst_99 = arith.constant dense<0.000000e+00> : vector<8x128xf32>
    %341 = tpu.matmul %300, %5, %cst_99 {dimension_numbers = #tpu.dot_dimension_numbers<[1], [0], [0], [1], [0, 0, 1, 1], [], []>} : vector<8x32xf32>, vector<32x128xf32>, vector<8x128xf32> -> vector<8x128xf32>
    %342 = arith.addf %340, %341 : vector<8x128xf32>
    %343 = arith.negf %342 : vector<8x128xf32>
    %344 = math.exp %343 : vector<8x128xf32>
    %cst_100 = arith.constant 1.000000e+00 : f32
    %345 = vector.broadcast %cst_100 : f32 to vector<8x128xf32>
    %346 = arith.addf %345, %344 : vector<8x128xf32>
    %347 = arith.divf %345, %346 : vector<8x128xf32>
    %348 = math.tanh %342 : vector<8x128xf32>
    %c64_i32_101 = arith.constant 64 : i32
    %349 = tpu.dynamic_rotate %348 by %c64_i32_101 dim 1 : vector<8x128xf32>, i32 -> vector<8x128xf32>
    %350 = arith.mulf %347, %349 : vector<8x128xf32>
    %351 = vector.extract_strided_slice %350 {offsets = [0, 0], sizes = [8, 32], strides = [1, 1]} : vector<8x128xf32> to vector<8x32xf32>
    %352 = vector.extract_strided_slice %347 {offsets = [0, 32], sizes = [8, 32], strides = [1, 1]} : vector<8x128xf32> to vector<8x32xf32>
    %353 = vector.extract_strided_slice %347 {offsets = [0, 96], sizes = [8, 32], strides = [1, 1]} : vector<8x128xf32> to vector<8x32xf32>
    %354 = arith.mulf %352, %298 : vector<8x32xf32>
    %355 = arith.addf %354, %351 : vector<8x32xf32>
    %356 = math.tanh %355 : vector<8x32xf32>
    %357 = arith.mulf %353, %356 : vector<8x32xf32>
    %c32_102 = arith.constant 32 : index
    %c0_103 = arith.constant 0 : index
    %358 = vector.load %arg13[%c32_102, %c0_103] : memref<64x32xf32, #tpu.memory_space<vmem>>, vector<8x32xf32>
    tpu.vector_store %arg13[%c32_102, %c0_103], %357 {strides = array<i32>} : memref<64x32xf32, #tpu.memory_space<vmem>>, vector<8x32xf32>,
    %c56 = arith.constant 56 : index
    %c0_104 = arith.constant 0 : index
    %359 = vector.load %arg12[%c56, %c0_104] : memref<64x128xf32, #tpu.memory_space<vmem>>, vector<8x128xf32>
    %cst_105 = arith.constant dense<0.000000e+00> : vector<8x128xf32>
    %360 = tpu.matmul %319, %3, %cst_105 {dimension_numbers = #tpu.dot_dimension_numbers<[1], [0], [0], [1], [0, 0, 1, 1], [], []>} : vector<8x32xf32>, vector<32x128xf32>, vector<8x128xf32> -> vector<8x128xf32>
    %361 = arith.addf %359, %360 : vector<8x128xf32>
    %362 = arith.negf %361 : vector<8x128xf32>
    %363 = math.exp %362 : vector<8x128xf32>
    %cst_106 = arith.constant 1.000000e+00 : f32
    %364 = vector.broadcast %cst_106 : f32 to vector<8x128xf32>
    %365 = arith.addf %364, %363 : vector<8x128xf32>
    %366 = arith.divf %364, %365 : vector<8x128xf32>
    %367 = math.tanh %361 : vector<8x128xf32>
    %c64_i32_107 = arith.constant 64 : i32
    %368 = tpu.dynamic_rotate %367 by %c64_i32_107 dim 1 : vector<8x128xf32>, i32 -> vector<8x128xf32>
    %369 = arith.mulf %366, %368 : vector<8x128xf32>
    %370 = vector.extract_strided_slice %369 {offsets = [0, 0], sizes = [8, 32], strides = [1, 1]} : vector<8x128xf32> to vector<8x32xf32>
    %371 = vector.extract_strided_slice %366 {offsets = [0, 32], sizes = [8, 32], strides = [1, 1]} : vector<8x128xf32> to vector<8x32xf32>
    %372 = vector.extract_strided_slice %366 {offsets = [0, 96], sizes = [8, 32], strides = [1, 1]} : vector<8x128xf32> to vector<8x32xf32>
    %373 = arith.mulf %371, %317 : vector<8x32xf32>
    %374 = arith.addf %373, %370 : vector<8x32xf32>
    %375 = math.tanh %374 : vector<8x32xf32>
    %376 = arith.mulf %372, %375 : vector<8x32xf32>
    %cst_108 = arith.constant dense<0.000000e+00> : vector<8x128xf32>
    %377 = tpu.matmul %319, %1, %cst_108 {dimension_numbers = #tpu.dot_dimension_numbers<[1], [0], [0], [1], [0, 0, 1, 1], [], []>} : vector<8x32xf32>, vector<32x128xf32>, vector<8x128xf32> -> vector<8x128xf32>
    %378 = arith.addf %377, %10 : vector<8x128xf32>
    %cst_109 = arith.constant dense<0.000000e+00> : vector<8x128xf32>
    %379 = tpu.matmul %338, %4, %cst_109 {dimension_numbers = #tpu.dot_dimension_numbers<[1], [0], [0], [1], [0, 0, 1, 1], [], []>} : vector<8x32xf32>, vector<32x128xf32>, vector<8x128xf32> -> vector<8x128xf32>
    %380 = arith.addf %378, %379 : vector<8x128xf32>
    %381 = arith.negf %380 : vector<8x128xf32>
    %382 = math.exp %381 : vector<8x128xf32>
    %cst_110 = arith.constant 1.000000e+00 : f32
    %383 = vector.broadcast %cst_110 : f32 to vector<8x128xf32>
    %384 = arith.addf %383, %382 : vector<8x128xf32>
    %385 = arith.divf %383, %384 : vector<8x128xf32>
    %386 = math.tanh %380 : vector<8x128xf32>
    %c64_i32_111 = arith.constant 64 : i32
    %387 = tpu.dynamic_rotate %386 by %c64_i32_111 dim 1 : vector<8x128xf32>, i32 -> vector<8x128xf32>
    %388 = arith.mulf %385, %387 : vector<8x128xf32>
    %389 = vector.extract_strided_slice %388 {offsets = [0, 0], sizes = [8, 32], strides = [1, 1]} : vector<8x128xf32> to vector<8x32xf32>
    %390 = vector.extract_strided_slice %385 {offsets = [0, 32], sizes = [8, 32], strides = [1, 1]} : vector<8x128xf32> to vector<8x32xf32>
    %391 = vector.extract_strided_slice %385 {offsets = [0, 96], sizes = [8, 32], strides = [1, 1]} : vector<8x128xf32> to vector<8x32xf32>
    %392 = arith.mulf %390, %336 : vector<8x32xf32>
    %393 = arith.addf %392, %389 : vector<8x32xf32>
    %394 = math.tanh %393 : vector<8x32xf32>
    %395 = arith.mulf %391, %394 : vector<8x32xf32>
    %cst_112 = arith.constant dense<0.000000e+00> : vector<8x128xf32>
    %396 = tpu.matmul %338, %2, %cst_112 {dimension_numbers = #tpu.dot_dimension_numbers<[1], [0], [0], [1], [0, 0, 1, 1], [], []>} : vector<8x32xf32>, vector<32x128xf32>, vector<8x128xf32> -> vector<8x128xf32>
    %397 = arith.addf %396, %12 : vector<8x128xf32>
    %cst_113 = arith.constant dense<0.000000e+00> : vector<8x128xf32>
    %398 = tpu.matmul %357, %5, %cst_113 {dimension_numbers = #tpu.dot_dimension_numbers<[1], [0], [0], [1], [0, 0, 1, 1], [], []>} : vector<8x32xf32>, vector<32x128xf32>, vector<8x128xf32> -> vector<8x128xf32>
    %399 = arith.addf %397, %398 : vector<8x128xf32>
    %400 = arith.negf %399 : vector<8x128xf32>
    %401 = math.exp %400 : vector<8x128xf32>
    %cst_114 = arith.constant 1.000000e+00 : f32
    %402 = vector.broadcast %cst_114 : f32 to vector<8x128xf32>
    %403 = arith.addf %402, %401 : vector<8x128xf32>
    %404 = arith.divf %402, %403 : vector<8x128xf32>
    %405 = math.tanh %399 : vector<8x128xf32>
    %c64_i32_115 = arith.constant 64 : i32
    %406 = tpu.dynamic_rotate %405 by %c64_i32_115 dim 1 : vector<8x128xf32>, i32 -> vector<8x128xf32>
    %407 = arith.mulf %404, %406 : vector<8x128xf32>
    %408 = vector.extract_strided_slice %407 {offsets = [0, 0], sizes = [8, 32], strides = [1, 1]} : vector<8x128xf32> to vector<8x32xf32>
    %409 = vector.extract_strided_slice %404 {offsets = [0, 32], sizes = [8, 32], strides = [1, 1]} : vector<8x128xf32> to vector<8x32xf32>
    %410 = vector.extract_strided_slice %404 {offsets = [0, 96], sizes = [8, 32], strides = [1, 1]} : vector<8x128xf32> to vector<8x32xf32>
    %411 = arith.mulf %409, %355 : vector<8x32xf32>
    %412 = arith.addf %411, %408 : vector<8x32xf32>
    %413 = math.tanh %412 : vector<8x32xf32>
    %414 = arith.mulf %410, %413 : vector<8x32xf32>
    %c40_116 = arith.constant 40 : index
    %c0_117 = arith.constant 0 : index
    %415 = vector.load %arg13[%c40_116, %c0_117] : memref<64x32xf32, #tpu.memory_space<vmem>>, vector<8x32xf32>
    tpu.vector_store %arg13[%c40_116, %c0_117], %414 {strides = array<i32>} : memref<64x32xf32, #tpu.memory_space<vmem>>, vector<8x32xf32>,
    %cst_118 = arith.constant dense<0.000000e+00> : vector<8x128xf32>
    %416 = tpu.matmul %376, %1, %cst_118 {dimension_numbers = #tpu.dot_dimension_numbers<[1], [0], [0], [1], [0, 0, 1, 1], [], []>} : vector<8x32xf32>, vector<32x128xf32>, vector<8x128xf32> -> vector<8x128xf32>
    %417 = arith.addf %416, %10 : vector<8x128xf32>
    %cst_119 = arith.constant dense<0.000000e+00> : vector<8x128xf32>
    %418 = tpu.matmul %395, %4, %cst_119 {dimension_numbers = #tpu.dot_dimension_numbers<[1], [0], [0], [1], [0, 0, 1, 1], [], []>} : vector<8x32xf32>, vector<32x128xf32>, vector<8x128xf32> -> vector<8x128xf32>
    %419 = arith.addf %417, %418 : vector<8x128xf32>
    %420 = arith.negf %419 : vector<8x128xf32>
    %421 = math.exp %420 : vector<8x128xf32>
    %cst_120 = arith.constant 1.000000e+00 : f32
    %422 = vector.broadcast %cst_120 : f32 to vector<8x128xf32>
    %423 = arith.addf %422, %421 : vector<8x128xf32>
    %424 = arith.divf %422, %423 : vector<8x128xf32>
    %425 = math.tanh %419 : vector<8x128xf32>
    %c64_i32_121 = arith.constant 64 : i32
    %426 = tpu.dynamic_rotate %425 by %c64_i32_121 dim 1 : vector<8x128xf32>, i32 -> vector<8x128xf32>
    %427 = arith.mulf %424, %426 : vector<8x128xf32>
    %428 = vector.extract_strided_slice %427 {offsets = [0, 0], sizes = [8, 32], strides = [1, 1]} : vector<8x128xf32> to vector<8x32xf32>
    %429 = vector.extract_strided_slice %424 {offsets = [0, 32], sizes = [8, 32], strides = [1, 1]} : vector<8x128xf32> to vector<8x32xf32>
    %430 = vector.extract_strided_slice %424 {offsets = [0, 96], sizes = [8, 32], strides = [1, 1]} : vector<8x128xf32> to vector<8x32xf32>
    %431 = arith.mulf %429, %393 : vector<8x32xf32>
    %432 = arith.addf %431, %428 : vector<8x32xf32>
    %433 = math.tanh %432 : vector<8x32xf32>
    %434 = arith.mulf %430, %433 : vector<8x32xf32>
    %cst_122 = arith.constant dense<0.000000e+00> : vector<8x128xf32>
    %435 = tpu.matmul %395, %2, %cst_122 {dimension_numbers = #tpu.dot_dimension_numbers<[1], [0], [0], [1], [0, 0, 1, 1], [], []>} : vector<8x32xf32>, vector<32x128xf32>, vector<8x128xf32> -> vector<8x128xf32>
    %436 = arith.addf %435, %12 : vector<8x128xf32>
    %cst_123 = arith.constant dense<0.000000e+00> : vector<8x128xf32>
    %437 = tpu.matmul %414, %5, %cst_123 {dimension_numbers = #tpu.dot_dimension_numbers<[1], [0], [0], [1], [0, 0, 1, 1], [], []>} : vector<8x32xf32>, vector<32x128xf32>, vector<8x128xf32> -> vector<8x128xf32>
    %438 = arith.addf %436, %437 : vector<8x128xf32>
    %439 = arith.negf %438 : vector<8x128xf32>
    %440 = math.exp %439 : vector<8x128xf32>
    %cst_124 = arith.constant 1.000000e+00 : f32
    %441 = vector.broadcast %cst_124 : f32 to vector<8x128xf32>
    %442 = arith.addf %441, %440 : vector<8x128xf32>
    %443 = arith.divf %441, %442 : vector<8x128xf32>
    %444 = math.tanh %438 : vector<8x128xf32>
    %c64_i32_125 = arith.constant 64 : i32
    %445 = tpu.dynamic_rotate %444 by %c64_i32_125 dim 1 : vector<8x128xf32>, i32 -> vector<8x128xf32>
    %446 = arith.mulf %443, %445 : vector<8x128xf32>
    %447 = vector.extract_strided_slice %446 {offsets = [0, 0], sizes = [8, 32], strides = [1, 1]} : vector<8x128xf32> to vector<8x32xf32>
    %448 = vector.extract_strided_slice %443 {offsets = [0, 32], sizes = [8, 32], strides = [1, 1]} : vector<8x128xf32> to vector<8x32xf32>
    %449 = vector.extract_strided_slice %443 {offsets = [0, 96], sizes = [8, 32], strides = [1, 1]} : vector<8x128xf32> to vector<8x32xf32>
    %450 = arith.mulf %448, %412 : vector<8x32xf32>
    %451 = arith.addf %450, %447 : vector<8x32xf32>
    %452 = math.tanh %451 : vector<8x32xf32>
    %453 = arith.mulf %449, %452 : vector<8x32xf32>
    %c48_126 = arith.constant 48 : index
    %c0_127 = arith.constant 0 : index
    %454 = vector.load %arg13[%c48_126, %c0_127] : memref<64x32xf32, #tpu.memory_space<vmem>>, vector<8x32xf32>
    tpu.vector_store %arg13[%c48_126, %c0_127], %453 {strides = array<i32>} : memref<64x32xf32, #tpu.memory_space<vmem>>, vector<8x32xf32>,
    %cst_128 = arith.constant dense<0.000000e+00> : vector<8x128xf32>
    %455 = tpu.matmul %434, %2, %cst_128 {dimension_numbers = #tpu.dot_dimension_numbers<[1], [0], [0], [1], [0, 0, 1, 1], [], []>} : vector<8x32xf32>, vector<32x128xf32>, vector<8x128xf32> -> vector<8x128xf32>
    %456 = arith.addf %455, %12 : vector<8x128xf32>
    %cst_129 = arith.constant dense<0.000000e+00> : vector<8x128xf32>
    %457 = tpu.matmul %453, %5, %cst_129 {dimension_numbers = #tpu.dot_dimension_numbers<[1], [0], [0], [1], [0, 0, 1, 1], [], []>} : vector<8x32xf32>, vector<32x128xf32>, vector<8x128xf32> -> vector<8x128xf32>
    %458 = arith.addf %456, %457 : vector<8x128xf32>
    %459 = arith.negf %458 : vector<8x128xf32>
    %460 = math.exp %459 : vector<8x128xf32>
    %cst_130 = arith.constant 1.000000e+00 : f32
    %461 = vector.broadcast %cst_130 : f32 to vector<8x128xf32>
    %462 = arith.addf %461, %460 : vector<8x128xf32>
    %463 = arith.divf %461, %462 : vector<8x128xf32>
    %464 = math.tanh %458 : vector<8x128xf32>
    %c64_i32_131 = arith.constant 64 : i32
    %465 = tpu.dynamic_rotate %464 by %c64_i32_131 dim 1 : vector<8x128xf32>, i32 -> vector<8x128xf32>
    %466 = arith.mulf %463, %465 : vector<8x128xf32>
    %467 = vector.extract_strided_slice %466 {offsets = [0, 0], sizes = [8, 32], strides = [1, 1]} : vector<8x128xf32> to vector<8x32xf32>
    %468 = vector.extract_strided_slice %463 {offsets = [0, 32], sizes = [8, 32], strides = [1, 1]} : vector<8x128xf32> to vector<8x32xf32>
    %469 = vector.extract_strided_slice %463 {offsets = [0, 96], sizes = [8, 32], strides = [1, 1]} : vector<8x128xf32> to vector<8x32xf32>
    %470 = arith.mulf %468, %451 : vector<8x32xf32>
    %471 = arith.addf %470, %467 : vector<8x32xf32>
    %472 = math.tanh %471 : vector<8x32xf32>
    %473 = arith.mulf %469, %472 : vector<8x32xf32>
    %c56_132 = arith.constant 56 : index
    %c0_133 = arith.constant 0 : index
    %474 = vector.load %arg13[%c56_132, %c0_133] : memref<64x32xf32, #tpu.memory_space<vmem>>, vector<8x32xf32>
    tpu.vector_store %arg13[%c56_132, %c0_133], %473 {strides = array<i32>} : memref<64x32xf32, #tpu.memory_space<vmem>>, vector<8x32xf32>,
    %c0_134 = arith.constant 0 : index
    %c0_135 = arith.constant 0 : index
    %475 = vector.load %arg13[%c0_134, %c0_135] : memref<64x32xf32, #tpu.memory_space<vmem>>, vector<64x32xf32>
    %c0_136 = arith.constant 0 : index
    %c0_137 = arith.constant 0 : index
    %476 = vector.load %arg10[%c0_136, %c0_137] : memref<32x4xf32, #tpu.memory_space<vmem>>, vector<32x4xf32>
    %cst_138 = arith.constant dense<0.000000e+00> : vector<64x4xf32>
    %477 = tpu.matmul %475, %476, %cst_138 {dimension_numbers = #tpu.dot_dimension_numbers<[1], [0], [0], [1], [0, 0, 1, 1], [], []>} : vector<64x32xf32>, vector<32x4xf32>, vector<64x4xf32> -> vector<64x4xf32>
    %c0_139 = arith.constant 0 : index
    %c0_140 = arith.constant 0 : index
    %478 = vector.load %arg11[%c0_139, %c0_140] : memref<64x4xf32, #tpu.memory_space<vmem>>, vector<64x4xf32>
    tpu.vector_store %arg11[%c0_139, %c0_140], %477 {strides = array<i32>} : memref<64x4xf32, #tpu.memory_space<vmem>>, vector<64x4xf32>,
    return
  }
}

</mosaic_0001>

<llo_original>
// kernel: _lambda_.1
$region0: #{_lambda_.1}
  #allocation0 [shape = 'u32[]', space=smem, size = 0x4, offset = 0x4, fixed_abs, tag = 'smem constant byte address 0x4 - core index']
  #allocation1 [shape = 'u32[72,128]{1,0:T(1,128)}', space=vmem, size = 0x9000, scoped, tag = 'internal scratch']
  #allocation2 [shape = 'f32[64,128]{1,0:T(8,128)}', space=vmem, size = 0x8000, scoped, tag = 'scratch operand']
  #allocation3 [shape = 'f32[64,32]{1,0:T(8,128)}', space=vmem, size = 0x8000, scoped, tag = 'scratch operand']
  %s0 = inlined_call_operand.vmem [shape: f32[64,8], index: 0, kind: input, shape index: {}]
  %s1 = inlined_call_operand.vmem [shape: f32[8,128], index: 1, kind: input, shape index: {}]
  %s2 = inlined_call_operand.hbm [shape: f32[32,128], index: 2, kind: input, shape index: {}]
  %s3 = inlined_call_operand.vmem [shape: f32[1,128], index: 3, kind: input, shape index: {}]
  %s4 = inlined_call_operand.vmem [shape: f32[32,128], index: 4, kind: input, shape index: {}]
  %s5 = inlined_call_operand.vmem [shape: f32[32,128], index: 5, kind: input, shape index: {}]
  %s6 = inlined_call_operand.vmem [shape: f32[1,128], index: 6, kind: input, shape index: {}]
  %s7 = inlined_call_operand.vmem [shape: f32[32,128], index: 7, kind: input, shape index: {}]
  %s8 = inlined_call_operand.vmem [shape: f32[32,128], index: 8, kind: input, shape index: {}]
  %s9 = inlined_call_operand.vmem [shape: f32[1,128], index: 9, kind: input, shape index: {}]
  %s10 = inlined_call_operand.hbm [shape: f32[32,4], index: 10, kind: input, shape index: {}]
  %s11 = inlined_call_operand.vmem [shape: f32[64,4], index: 11, kind: output, shape index: {}]
  %s12 = sld [smem:[#allocation0]]
  $region62: #{_lambda_.1} parent=0
    _
  %s14 = ssub.s32 1, %s12
  %s15 = scalar_select 0, %s14, %s12
  $region1: #{_lambda_.1} parent=0
    #allocation4 [shape = 'u8[16384]{0}', space=vmem, size = 0x4000, scoped, tag = 'input window, operand 2, single buffered']
    #allocation5 [shape = 's32[1]{0}', space=sflag, size = 0x4, scoped, tag = 'scoped memory for _lambda_.1']
    #allocation6 [shape = 'u8[16384]{0}', space=vmem, size = 0x4000, scoped, tag = 'input window, operand 10, single buffered']
    #allocation7 [shape = 's32[1]{0}', space=sflag, size = 0x4, scoped, tag = 'scoped memory for _lambda_.1']
    %16 = vsyncpa [#allocation5], 0
    %17 = vsyncpa [#allocation7], 0
    // Predicated region
    $region2: #{_lambda_.1} parent=1 // pred_check
      _
    $region3: #{_lambda_.1} parent=1 // pred_check_branch
      %19 = sbr.rel (0) target = $region5
    $region4: #{_lambda_.1} parent=1 // pred_region
      _
    $region5: #{_lambda_.1} parent=1 // pred_fallthru
      _
    // Predicated region
    $region6: #{_lambda_.1} parent=1 // pred_check
      _
    $region7: #{_lambda_.1} parent=1 // pred_check_branch
      %21 = sbr.rel (0) target = $region9
    $region8: #{_lambda_.1} parent=1 // pred_region
      _
    $region9: #{_lambda_.1} parent=1 // pred_fallthru
      _
    // Predicated region
    $region10: #{_lambda_.1} parent=1 // pred_check
      _
    $region11: #{_lambda_.1} parent=1 // pred_check_branch
      %23 = sbr.rel (0) target = $region13
    $region12: #{_lambda_.1} parent=1 // pred_region
      %25 = vsyncadd [#allocation5], 0
      %s26 = sshll.u32 %s2, 4
      %s27 = int_to_ptr.hbm [resolvable:$true] %s26
      %s28 = sshll.u32 [#allocation4], 4
      %s29 = int_to_ptr.vmem [resolvable:$true] %s28
      %34 = dma.hbm_to_vmem [thread:$0]  %s27, 512, %s29, [#allocation5], 128, 128, 8
    $region13: #{_lambda_.1} parent=1 // pred_fallthru
      _
    // Predicated region
    $region14: #{_lambda_.1} parent=1 // pred_check
      _
    $region15: #{_lambda_.1} parent=1 // pred_check_branch
      %36 = sbr.rel (0) target = $region17
    $region16: #{_lambda_.1} parent=1 // pred_region
      _
    $region17: #{_lambda_.1} parent=1 // pred_fallthru
      _
    // Predicated region
    $region18: #{_lambda_.1} parent=1 // pred_check
      _
    $region19: #{_lambda_.1} parent=1 // pred_check_branch
      %38 = sbr.rel (0) target = $region21
    $region20: #{_lambda_.1} parent=1 // pred_region
      _
    $region21: #{_lambda_.1} parent=1 // pred_fallthru
      _
    // Predicated region
    $region22: #{_lambda_.1} parent=1 // pred_check
      _
    $region23: #{_lambda_.1} parent=1 // pred_check_branch
      %40 = sbr.rel (0) target = $region25
    $region24: #{_lambda_.1} parent=1 // pred_region
      _
    $region25: #{_lambda_.1} parent=1 // pred_fallthru
      _
    // Predicated region
    $region26: #{_lambda_.1} parent=1 // pred_check
      _
    $region27: #{_lambda_.1} parent=1 // pred_check_branch
      %42 = sbr.rel (0) target = $region29
    $region28: #{_lambda_.1} parent=1 // pred_region
      _
    $region29: #{_lambda_.1} parent=1 // pred_fallthru
      _
    // Predicated region
    $region30: #{_lambda_.1} parent=1 // pred_check
      _
    $region31: #{_lambda_.1} parent=1 // pred_check_branch
      %44 = sbr.rel (0) target = $region33
    $region32: #{_lambda_.1} parent=1 // pred_region
      _
    $region33: #{_lambda_.1} parent=1 // pred_fallthru
      _
    // Predicated region
    $region34: #{_lambda_.1} parent=1 // pred_check
      _
    $region35: #{_lambda_.1} parent=1 // pred_check_branch
      %46 = sbr.rel (0) target = $region37
    $region36: #{_lambda_.1} parent=1 // pred_region
      _
    $region37: #{_lambda_.1} parent=1 // pred_fallthru
      _
    // Predicated region
    $region38: #{_lambda_.1} parent=1 // pred_check
      _
    $region39: #{_lambda_.1} parent=1 // pred_check_branch
      %48 = sbr.rel (0) target = $region41
    $region40: #{_lambda_.1} parent=1 // pred_region
      _
    $region41: #{_lambda_.1} parent=1 // pred_fallthru
      _
    // Predicated region
    $region42: #{_lambda_.1} parent=1 // pred_check
      _
    $region43: #{_lambda_.1} parent=1 // pred_check_branch
      %50 = sbr.rel (0) target = $region45
    $region44: #{_lambda_.1} parent=1 // pred_region
      %52 = vsyncadd [#allocation7], 0
      %s53 = sshll.u32 %s10, 4
      %s54 = int_to_ptr.hbm [resolvable:$true] %s53
      %s55 = sshll.u32 [#allocation6], 4
      %s56 = int_to_ptr.vmem [resolvable:$true] %s55
      %61 = dma.hbm_to_vmem [thread:$0]  %s54, 512, %s56, [#allocation7], 128, 128, 8
    $region45: #{_lambda_.1} parent=1 // pred_fallthru
      _
    // Predicated region
    $region46: #{_lambda_.1} parent=1 // pred_check
      _
    $region47: #{_lambda_.1} parent=1 // pred_check_branch
      %63 = sbr.rel (0) target = $region49
    $region48: #{_lambda_.1} parent=1 // pred_region
      %65 = dma.done [#allocation5], 512
    $region49: #{_lambda_.1} parent=1 // pred_fallthru
      _
    // Predicated region
    $region50: #{_lambda_.1} parent=1 // pred_check
      _
    $region51: #{_lambda_.1} parent=1 // pred_check_branch
      %67 = sbr.rel (0) target = $region53
    $region52: #{_lambda_.1} parent=1 // pred_region
      %69 = dma.done [#allocation7], 512
    $region53: #{_lambda_.1} parent=1 // pred_fallthru
      _
    %v70 = vld [vmem:[%s1] sm:$0xff]
    %v71 = vld [vmem:[%s4] sm:$0xff]
    %v72 = vld [vmem:[%s4 + $0x8] sm:$0xff]
    %v73 = vld [vmem:[%s4 + $0x10] sm:$0xff]
    %v74 = vld [vmem:[%s4 + $0x18] sm:$0xff]
    %v75 = vld [vmem:[%s7] sm:$0xff]
    %v76 = vld [vmem:[%s7 + $0x8] sm:$0xff]
    %v77 = vld [vmem:[%s7 + $0x10] sm:$0xff]
    %v78 = vld [vmem:[%s7 + $0x18] sm:$0xff]
    %v79 = vld [vmem:[#allocation4] sm:$0xff]
    %v80 = vld [vmem:[#allocation4 + $0x8] sm:$0xff]
    %v81 = vld [vmem:[#allocation4 + $0x10] sm:$0xff]
    %v82 = vld [vmem:[#allocation4 + $0x18] sm:$0xff]
    %v83 = vld [vmem:[%s5] sm:$0xff]
    %v84 = vld [vmem:[%s5 + $0x8] sm:$0xff]
    %v85 = vld [vmem:[%s5 + $0x10] sm:$0xff]
    %v86 = vld [vmem:[%s5 + $0x18] sm:$0xff]
    %v87 = vld [vmem:[%s8] sm:$0xff]
    %v88 = vld [vmem:[%s8 + $0x8] sm:$0xff]
    %v89 = vld [vmem:[%s8 + $0x10] sm:$0xff]
    %v90 = vld [vmem:[%s8 + $0x18] sm:$0xff]
    %v91 = vld [vmem:[%s3] sm:$0x1]
    %v92 = vld [vmem:[%s6] sm:$0x1]
    %v93 = vld [vmem:[%s9] sm:$0x1]
    %v95 = vperm.slane %v92, 0
    %v98 = vperm.slane %v93, 0
    %v100 = vld [vmem:[%s0] sm:$0xff]
    %v101 = vld [vmem:[%s0 + $0x8] sm:$0xff]
    %v102 = vld [vmem:[%s0 + $0x10] sm:$0xff]
    %v103 = vld [vmem:[%s0 + $0x18] sm:$0xff]
    %v104 = vld [vmem:[%s0 + $0x20] sm:$0xff]
    %v105 = vld [vmem:[%s0 + $0x28] sm:$0xff]
    %v106 = vld [vmem:[%s0 + $0x30] sm:$0xff]
    %v107 = vld [vmem:[%s0 + $0x38] sm:$0xff]
    %v109 = vperm.slane %v91, 0
    %vm111 = vcmask 64512
    %v113 = vsel %vm111, %v100, 0
    %v116 = vsel %vm111, %v101, 0
    %v119 = vsel %vm111, %v102, 0
    %v122 = vsel %vm111, %v103, 0
    %v125 = vsel %vm111, %v104, 0
    %v128 = vsel %vm111, %v105, 0
    %v131 = vsel %vm111, %v106, 0
    %v134 = vsel %vm111, %v107, 0
    %136 = vmatpush.msra.mxu0 0.0
    %137 = vmatpush.msra.mxu0 0.0
    %138 = vmatpush.msra.mxu0 0.0
    %139 = vmatpush.msra.mxu0 0.0
    %140 = vmatpush.msra.mxu0 0.0
    %141 = vmatpush.msra.mxu0 0.0
    %142 = vmatpush.msra.mxu0 0.0
    %143 = vmatpush.msra.mxu0 0.0
    %144 = vmatpush.msra.mxu0 0.0
    %145 = vmatpush.msra.mxu0 0.0
    %146 = vmatpush.msra.mxu0 0.0
    %147 = vmatpush.msra.mxu0 0.0
    %148 = vmatpush.msra.mxu0 0.0
    %149 = vmatpush.msra.mxu0 0.0
    %150 = vmatpush.msra.mxu0 0.0
    %151 = vmatpush.msra.mxu0 %v70
    %152 = vmatmul.f32.gmra.mxu0 %v113
    %v153 = vpop.f32.mrf.mxu0
    %v154 = vadd.f32 %v109, %v153
    %155 = vmatmul.f32.gmra.mxu0 %v116
    %v156 = vpop.f32.mrf.mxu0
    %v157 = vadd.f32 %v109, %v156
    %158 = vmatmul.f32.gmra.mxu0 %v119
    %v159 = vpop.f32.mrf.mxu0
    %v160 = vadd.f32 %v109, %v159
    %161 = vmatmul.f32.gmra.mxu0 %v122
    %v162 = vpop.f32.mrf.mxu0
    %v163 = vadd.f32 %v109, %v162
    %164 = vmatmul.f32.gmra.mxu0 %v125
    %v165 = vpop.f32.mrf.mxu0
    %v166 = vadd.f32 %v109, %v165
    %167 = vmatmul.f32.gmra.mxu0 %v128
    %v168 = vpop.f32.mrf.mxu0
    %v169 = vadd.f32 %v109, %v168
    %170 = vmatmul.f32.gmra.mxu0 %v131
    %v171 = vpop.f32.mrf.mxu0
    %v172 = vadd.f32 %v109, %v171
    %173 = vmatmul.f32.gmra.mxu0 %v134
    %v174 = vpop.f32.mrf.mxu0
    %v175 = vadd.f32 %v109, %v174
    %176 = vdwg.mxu0
    %177 = vst [vmem:[#allocation2] sm:$0xff] %v154
    %178 = vst [vmem:[#allocation2 + $0x8] sm:$0xff] %v157
    %179 = vst [vmem:[#allocation2 + $0x10] sm:$0xff] %v160
    %180 = vst [vmem:[#allocation2 + $0x18] sm:$0xff] %v163
    %181 = vst [vmem:[#allocation2 + $0x20] sm:$0xff] %v166
    %182 = vst [vmem:[#allocation2 + $0x28] sm:$0xff] %v169
    %183 = vst [vmem:[#allocation2 + $0x30] sm:$0xff] %v172
    %184 = vst [vmem:[#allocation2 + $0x38] sm:$0xff] %v175
    %v185 = vld [vmem:[#allocation2] sm:$0xff]
    %vm186 = vcmask 261120
    %v188 = vsel %vm186, 0.0, 0
    %190 = vmatpush.msra.mxu0 0.0
    %191 = vmatpush.msra.mxu0 0.0
    %192 = vmatpush.msra.mxu0 0.0
    %193 = vmatpush.msra.mxu0 0.0
    %194 = vmatpush.msra.mxu0 0.0
    %195 = vmatpush.msra.mxu0 0.0
    %196 = vmatpush.msra.mxu0 0.0
    %197 = vmatpush.msra.mxu0 0.0
    %198 = vmatpush.msra.mxu0 0.0
    %199 = vmatpush.msra.mxu0 0.0
    %200 = vmatpush.msra.mxu0 0.0
    %201 = vmatpush.msra.mxu0 0.0
    %202 = vmatpush.msra.mxu0 %v82
    %203 = vmatpush.msra.mxu0 %v81
    %204 = vmatpush.msra.mxu0 %v80
    %205 = vmatpush.msra.mxu0 %v79
    %206 = vmatmul.f32.gmra.mxu0 %v188
    %v207 = vpop.f32.mrf.mxu0
    %v208 = vadd.f32 0.0, %v207
    %209 = vdwg.mxu0
    %v210 = vadd.f32 %v185, %v208
    %v211 = vxor.u32 %v210, 2147483648
    %v212 = vmul.f32 %v211, 1.442695
    %v213 = vpow.pop %v212
    %v214 = vadd.f32 %v213, 1.0
    %v215 = vrcp.pop %v214
    %v216 = vmul.f32 %v214, %v215
    %v217 = vsub.f32 1.0, %v216
    %v218 = vmul.f32 %v215, %v217
    %v219 = vadd.f32 %v215, %v218
    %vm220 = vweird.f32 %v214
    %vm221 = vweird.f32 %v215
    %vm222 = vmor %vm220, %vm221
    %v223 = vsel %vm222, %v215, %v219
    %v224 = vand.u32 2147483647, %v214
    %vm225 = vcmp.eq.f32.partialorder %v224, 8.507059e+37
    %v226 = vand.u32 %v214, 2147483648
    %v227 = vor.u32 1.1754944e-38, %v226
    %v228 = vsel %vm225, %v227, %v223
    %v229 = vmul.f32 1.0, %v228
    %v230 = vtanh.pop %v210
    %231 = vrot.lane.b32.xlu0 %v230, 64
    %v232 = vpop.permute.xlu0 %231
    %v233 = vmul.f32 %v229, %v232
    %v234 = vmul.f32 %v229, 0.0
    %236 = vrot.lane.b32.xlu0 %v233, 32
    %v237 = vpop.permute.xlu0 %236
    %v239 = vadd.f32 %v234, %v237
    %v240 = vtanh.pop %v239
    %242 = vrot.lane.b32.xlu0 %v240, 64
    %v243 = vpop.permute.xlu0 %242
    %v245 = vmul.f32 %v229, %v243
    %v246 = vld [vmem:[#allocation2 + $0x8] sm:$0xff]
    %248 = vrot.lane.b32.xlu0 %v245, 32
    %v249 = vpop.permute.xlu0 %248
    %v250 = vsel %vm186, %v249, 0
    %252 = vmatpush.msra.mxu0 0.0
    %253 = vmatpush.msra.mxu0 0.0
    %254 = vmatpush.msra.mxu0 0.0
    %255 = vmatpush.msra.mxu0 0.0
    %256 = vmatpush.msra.mxu0 0.0
    %257 = vmatpush.msra.mxu0 0.0
    %258 = vmatpush.msra.mxu0 0.0
    %259 = vmatpush.msra.mxu0 0.0
    %260 = vmatpush.msra.mxu0 0.0
    %261 = vmatpush.msra.mxu0 0.0
    %262 = vmatpush.msra.mxu0 0.0
    %263 = vmatpush.msra.mxu0 0.0
    %264 = vmatpush.msra.mxu0 %v82
    %265 = vmatpush.msra.mxu0 %v81
    %266 = vmatpush.msra.mxu0 %v80
    %267 = vmatpush.msra.mxu0 %v79
    %268 = vmatmul.f32.gmra.mxu0 %v250
    %v269 = vpop.f32.mrf.mxu0
    %v270 = vadd.f32 0.0, %v269
    %271 = vdwg.mxu0
    %v272 = vadd.f32 %v246, %v270
    %v273 = vxor.u32 %v272, 2147483648
    %v274 = vmul.f32 %v273, 1.442695
    %v275 = vpow.pop %v274
    %v276 = vadd.f32 %v275, 1.0
    %v277 = vrcp.pop %v276
    %v278 = vmul.f32 %v276, %v277
    %v279 = vsub.f32 1.0, %v278
    %v280 = vmul.f32 %v277, %v279
    %v281 = vadd.f32 %v277, %v280
    %vm282 = vweird.f32 %v276
    %vm283 = vweird.f32 %v277
    %vm284 = vmor %vm282, %vm283
    %v285 = vsel %vm284, %v277, %v281
    %v286 = vand.u32 2147483647, %v276
    %vm287 = vcmp.eq.f32.partialorder %v286, 8.507059e+37
    %v288 = vand.u32 %v276, 2147483648
    %v289 = vor.u32 1.1754944e-38, %v288
    %v290 = vsel %vm287, %v289, %v285
    %v291 = vmul.f32 1.0, %v290
    %v292 = vtanh.pop %v272
    %293 = vrot.lane.b32.xlu0 %v292, 64
    %v294 = vpop.permute.xlu0 %293
    %v295 = vmul.f32 %v291, %v294
    %v296 = vmul.f32 %v291, %v239
    %298 = vrot.lane.b32.xlu0 %v295, 32
    %v299 = vpop.permute.xlu0 %298
    %v301 = vadd.f32 %v296, %v299
    %v302 = vtanh.pop %v301
    %304 = vrot.lane.b32.xlu0 %v302, 64
    %v305 = vpop.permute.xlu0 %304
    %v307 = vmul.f32 %v291, %v305
    %308 = vmatpush.msra.mxu0 0.0
    %309 = vmatpush.msra.mxu0 0.0
    %310 = vmatpush.msra.mxu0 0.0
    %311 = vmatpush.msra.mxu0 0.0
    %312 = vmatpush.msra.mxu0 0.0
    %313 = vmatpush.msra.mxu0 0.0
    %314 = vmatpush.msra.mxu0 0.0
    %315 = vmatpush.msra.mxu0 0.0
    %316 = vmatpush.msra.mxu0 0.0
    %317 = vmatpush.msra.mxu0 0.0
    %318 = vmatpush.msra.mxu0 0.0
    %319 = vmatpush.msra.mxu0 0.0
    %320 = vmatpush.msra.mxu0 %v74
    %321 = vmatpush.msra.mxu0 %v73
    %322 = vmatpush.msra.mxu0 %v72
    %323 = vmatpush.msra.mxu0 %v71
    %324 = vmatmul.f32.gmra.mxu0 %v250
    %v325 = vpop.f32.mrf.mxu0
    %v326 = vadd.f32 %v95, %v325
    %327 = vdwg.mxu0
    %328 = vmatpush.msra.mxu0 0.0
    %329 = vmatpush.msra.mxu0 0.0
    %330 = vmatpush.msra.mxu0 0.0
    %331 = vmatpush.msra.mxu0 0.0
    %332 = vmatpush.msra.mxu0 0.0
    %333 = vmatpush.msra.mxu0 0.0
    %334 = vmatpush.msra.mxu0 0.0
    %335 = vmatpush.msra.mxu0 0.0
    %336 = vmatpush.msra.mxu0 0.0
    %337 = vmatpush.msra.mxu0 0.0
    %338 = vmatpush.msra.mxu0 0.0
    %339 = vmatpush.msra.mxu0 0.0
    %340 = vmatpush.msra.mxu0 %v86
    %341 = vmatpush.msra.mxu0 %v85
    %342 = vmatpush.msra.mxu0 %v84
    %343 = vmatpush.msra.mxu0 %v83
    %344 = vmatmul.f32.gmra.mxu0 %v188
    %v345 = vpop.f32.mrf.mxu0
    %v346 = vadd.f32 0.0, %v345
    %347 = vdwg.mxu0
    %v348 = vadd.f32 %v326, %v346
    %v349 = vxor.u32 %v348, 2147483648
    %v350 = vmul.f32 %v349, 1.442695
    %v351 = vpow.pop %v350
    %v352 = vadd.f32 %v351, 1.0
    %v353 = vrcp.pop %v352
    %v354 = vmul.f32 %v352, %v353
    %v355 = vsub.f32 1.0, %v354
    %v356 = vmul.f32 %v353, %v355
    %v357 = vadd.f32 %v353, %v356
    %vm358 = vweird.f32 %v352
    %vm359 = vweird.f32 %v353
    %vm360 = vmor %vm358, %vm359
    %v361 = vsel %vm360, %v353, %v357
    %v362 = vand.u32 2147483647, %v352
    %vm363 = vcmp.eq.f32.partialorder %v362, 8.507059e+37
    %v364 = vand.u32 %v352, 2147483648
    %v365 = vor.u32 1.1754944e-38, %v364
    %v366 = vsel %vm363, %v365, %v361
    %v367 = vmul.f32 1.0, %v366
    %v368 = vtanh.pop %v348
    %369 = vrot.lane.b32.xlu0 %v368, 64
    %v370 = vpop.permute.xlu0 %369
    %v371 = vmul.f32 %v367, %v370
    %v372 = vmul.f32 %v367, 0.0
    %374 = vrot.lane.b32.xlu0 %v371, 32
    %v375 = vpop.permute.xlu0 %374
    %v377 = vadd.f32 %v372, %v375
    %v378 = vtanh.pop %v377
    %380 = vrot.lane.b32.xlu0 %v378, 64
    %v381 = vpop.permute.xlu0 %380
    %v383 = vmul.f32 %v367, %v381
    %v384 = vld [vmem:[#allocation2 + $0x10] sm:$0xff]
    %386 = vrot.lane.b32.xlu0 %v307, 32
    %v387 = vpop.permute.xlu0 %386
    %v388 = vsel %vm186, %v387, 0
    %390 = vmatpush.msra.mxu0 0.0
    %391 = vmatpush.msra.mxu0 0.0
    %392 = vmatpush.msra.mxu0 0.0
    %393 = vmatpush.msra.mxu0 0.0
    %394 = vmatpush.msra.mxu0 0.0
    %395 = vmatpush.msra.mxu0 0.0
    %396 = vmatpush.msra.mxu0 0.0
    %397 = vmatpush.msra.mxu0 0.0
    %398 = vmatpush.msra.mxu0 0.0
    %399 = vmatpush.msra.mxu0 0.0
    %400 = vmatpush.msra.mxu0 0.0
    %401 = vmatpush.msra.mxu0 0.0
    %402 = vmatpush.msra.mxu0 %v82
    %403 = vmatpush.msra.mxu0 %v81
    %404 = vmatpush.msra.mxu0 %v80
    %405 = vmatpush.msra.mxu0 %v79
    %406 = vmatmul.f32.gmra.mxu0 %v388
    %v407 = vpop.f32.mrf.mxu0
    %v408 = vadd.f32 0.0, %v407
    %409 = vdwg.mxu0
    %v410 = vadd.f32 %v384, %v408
    %v411 = vxor.u32 %v410, 2147483648
    %v412 = vmul.f32 %v411, 1.442695
    %v413 = vpow.pop %v412
    %v414 = vadd.f32 %v413, 1.0
    %v415 = vrcp.pop %v414
    %v416 = vmul.f32 %v414, %v415
    %v417 = vsub.f32 1.0, %v416
    %v418 = vmul.f32 %v415, %v417
    %v419 = vadd.f32 %v415, %v418
    %vm420 = vweird.f32 %v414
    %vm421 = vweird.f32 %v415
    %vm422 = vmor %vm420, %vm421
    %v423 = vsel %vm422, %v415, %v419
    %v424 = vand.u32 2147483647, %v414
    %vm425 = vcmp.eq.f32.partialorder %v424, 8.507059e+37
    %v426 = vand.u32 %v414, 2147483648
    %v427 = vor.u32 1.1754944e-38, %v426
    %v428 = vsel %vm425, %v427, %v423
    %v429 = vmul.f32 1.0, %v428
    %v430 = vtanh.pop %v410
    %431 = vrot.lane.b32.xlu0 %v430, 64
    %v432 = vpop.permute.xlu0 %431
    %v433 = vmul.f32 %v429, %v432
    %v434 = vmul.f32 %v429, %v301
    %436 = vrot.lane.b32.xlu0 %v433, 32
    %v437 = vpop.permute.xlu0 %436
    %v439 = vadd.f32 %v434, %v437
    %v440 = vtanh.pop %v439
    %442 = vrot.lane.b32.xlu0 %v440, 64
    %v443 = vpop.permute.xlu0 %442
    %v445 = vmul.f32 %v429, %v443
    %446 = vmatpush.msra.mxu0 0.0
    %447 = vmatpush.msra.mxu0 0.0
    %448 = vmatpush.msra.mxu0 0.0
    %449 = vmatpush.msra.mxu0 0.0
    %450 = vmatpush.msra.mxu0 0.0
    %451 = vmatpush.msra.mxu0 0.0
    %452 = vmatpush.msra.mxu0 0.0
    %453 = vmatpush.msra.mxu0 0.0
    %454 = vmatpush.msra.mxu0 0.0
    %455 = vmatpush.msra.mxu0 0.0
    %456 = vmatpush.msra.mxu0 0.0
    %457 = vmatpush.msra.mxu0 0.0
    %458 = vmatpush.msra.mxu0 %v74
    %459 = vmatpush.msra.mxu0 %v73
    %460 = vmatpush.msra.mxu0 %v72
    %461 = vmatpush.msra.mxu0 %v71
    %462 = vmatmul.f32.gmra.mxu0 %v388
    %v463 = vpop.f32.mrf.mxu0
    %v464 = vadd.f32 %v95, %v463
    %465 = vdwg.mxu0
    %467 = vrot.lane.b32.xlu0 %v383, 32
    %v468 = vpop.permute.xlu0 %467
    %v469 = vsel %vm186, %v468, 0
    %471 = vmatpush.msra.mxu0 0.0
    %472 = vmatpush.msra.mxu0 0.0
    %473 = vmatpush.msra.mxu0 0.0
    %474 = vmatpush.msra.mxu0 0.0
    %475 = vmatpush.msra.mxu0 0.0
    %476 = vmatpush.msra.mxu0 0.0
    %477 = vmatpush.msra.mxu0 0.0
    %478 = vmatpush.msra.mxu0 0.0
    %479 = vmatpush.msra.mxu0 0.0
    %480 = vmatpush.msra.mxu0 0.0
    %481 = vmatpush.msra.mxu0 0.0
    %482 = vmatpush.msra.mxu0 0.0
    %483 = vmatpush.msra.mxu0 %v86
    %484 = vmatpush.msra.mxu0 %v85
    %485 = vmatpush.msra.mxu0 %v84
    %486 = vmatpush.msra.mxu0 %v83
    %487 = vmatmul.f32.gmra.mxu0 %v469
    %v488 = vpop.f32.mrf.mxu0
    %v489 = vadd.f32 0.0, %v488
    %490 = vdwg.mxu0
    %v491 = vadd.f32 %v464, %v489
    %v492 = vxor.u32 %v491, 2147483648
    %v493 = vmul.f32 %v492, 1.442695
    %v494 = vpow.pop %v493
    %v495 = vadd.f32 %v494, 1.0
    %v496 = vrcp.pop %v495
    %v497 = vmul.f32 %v495, %v496
    %v498 = vsub.f32 1.0, %v497
    %v499 = vmul.f32 %v496, %v498
    %v500 = vadd.f32 %v496, %v499
    %vm501 = vweird.f32 %v495
    %vm502 = vweird.f32 %v496
    %vm503 = vmor %vm501, %vm502
    %v504 = vsel %vm503, %v496, %v500
    %v505 = vand.u32 2147483647, %v495
    %vm506 = vcmp.eq.f32.partialorder %v505, 8.507059e+37
    %v507 = vand.u32 %v495, 2147483648
    %v508 = vor.u32 1.1754944e-38, %v507
    %v509 = vsel %vm506, %v508, %v504
    %v510 = vmul.f32 1.0, %v509
    %v511 = vtanh.pop %v491
    %512 = vrot.lane.b32.xlu0 %v511, 64
    %v513 = vpop.permute.xlu0 %512
    %v514 = vmul.f32 %v510, %v513
    %v515 = vmul.f32 %v510, %v377
    %517 = vrot.lane.b32.xlu0 %v514, 32
    %v518 = vpop.permute.xlu0 %517
    %v520 = vadd.f32 %v515, %v518
    %v521 = vtanh.pop %v520
    %523 = vrot.lane.b32.xlu0 %v521, 64
    %v524 = vpop.permute.xlu0 %523
    %v526 = vmul.f32 %v510, %v524
    %527 = vmatpush.msra.mxu0 0.0
    %528 = vmatpush.msra.mxu0 0.0
    %529 = vmatpush.msra.mxu0 0.0
    %530 = vmatpush.msra.mxu0 0.0
    %531 = vmatpush.msra.mxu0 0.0
    %532 = vmatpush.msra.mxu0 0.0
    %533 = vmatpush.msra.mxu0 0.0
    %534 = vmatpush.msra.mxu0 0.0
    %535 = vmatpush.msra.mxu0 0.0
    %536 = vmatpush.msra.mxu0 0.0
    %537 = vmatpush.msra.mxu0 0.0
    %538 = vmatpush.msra.mxu0 0.0
    %539 = vmatpush.msra.mxu0 %v78
    %540 = vmatpush.msra.mxu0 %v77
    %541 = vmatpush.msra.mxu0 %v76
    %542 = vmatpush.msra.mxu0 %v75
    %543 = vmatmul.f32.gmra.mxu0 %v469
    %v544 = vpop.f32.mrf.mxu0
    %v545 = vadd.f32 %v98, %v544
    %546 = vdwg.mxu0
    %547 = vmatpush.msra.mxu0 0.0
    %548 = vmatpush.msra.mxu0 0.0
    %549 = vmatpush.msra.mxu0 0.0
    %550 = vmatpush.msra.mxu0 0.0
    %551 = vmatpush.msra.mxu0 0.0
    %552 = vmatpush.msra.mxu0 0.0
    %553 = vmatpush.msra.mxu0 0.0
    %554 = vmatpush.msra.mxu0 0.0
    %555 = vmatpush.msra.mxu0 0.0
    %556 = vmatpush.msra.mxu0 0.0
    %557 = vmatpush.msra.mxu0 0.0
    %558 = vmatpush.msra.mxu0 0.0
    %559 = vmatpush.msra.mxu0 %v90
    %560 = vmatpush.msra.mxu0 %v89
    %561 = vmatpush.msra.mxu0 %v88
    %562 = vmatpush.msra.mxu0 %v87
    %563 = vmatmul.f32.gmra.mxu0 %v188
    %v564 = vpop.f32.mrf.mxu0
    %v565 = vadd.f32 0.0, %v564
    %566 = vdwg.mxu0
    %v567 = vadd.f32 %v545, %v565
    %v568 = vxor.u32 %v567, 2147483648
    %v569 = vmul.f32 %v568, 1.442695
    %v570 = vpow.pop %v569
    %v571 = vadd.f32 %v570, 1.0
    %v572 = vrcp.pop %v571
    %v573 = vmul.f32 %v571, %v572
    %v574 = vsub.f32 1.0, %v573
    %v575 = vmul.f32 %v572, %v574
    %v576 = vadd.f32 %v572, %v575
    %vm577 = vweird.f32 %v571
    %vm578 = vweird.f32 %v572
    %vm579 = vmor %vm577, %vm578
    %v580 = vsel %vm579, %v572, %v576
    %v581 = vand.u32 2147483647, %v571
    %vm582 = vcmp.eq.f32.partialorder %v581, 8.507059e+37
    %v583 = vand.u32 %v571, 2147483648
    %v584 = vor.u32 1.1754944e-38, %v583
    %v585 = vsel %vm582, %v584, %v580
    %v586 = vmul.f32 1.0, %v585
    %v587 = vtanh.pop %v567
    %588 = vrot.lane.b32.xlu0 %v587, 64
    %v589 = vpop.permute.xlu0 %588
    %v590 = vmul.f32 %v586, %v589
    %v591 = vmul.f32 %v586, 0.0
    %593 = vrot.lane.b32.xlu0 %v590, 32
    %v594 = vpop.permute.xlu0 %593
    %v596 = vadd.f32 %v591, %v594
    %v597 = vtanh.pop %v596
    %599 = vrot.lane.b32.xlu0 %v597, 64
    %v600 = vpop.permute.xlu0 %599
    %v602 = vmul.f32 %v586, %v600
    %604 = vrot.lane.b32.xlu0 %v602, 32
    %v605 = vpop.permute.xlu0 %604
    %607 = vst.msk [vmem:[#allocation3] sm:$0xff] %vm186, %v605
    %v608 = vld [vmem:[#allocation2 + $0x18] sm:$0xff]
    %610 = vrot.lane.b32.xlu0 %v445, 32
    %v611 = vpop.permute.xlu0 %610
    %v612 = vsel %vm186, %v611, 0
    %614 = vmatpush.msra.mxu0 0.0
    %615 = vmatpush.msra.mxu0 0.0
    %616 = vmatpush.msra.mxu0 0.0
    %617 = vmatpush.msra.mxu0 0.0
    %618 = vmatpush.msra.mxu0 0.0
    %619 = vmatpush.msra.mxu0 0.0
    %620 = vmatpush.msra.mxu0 0.0
    %621 = vmatpush.msra.mxu0 0.0
    %622 = vmatpush.msra.mxu0 0.0
    %623 = vmatpush.msra.mxu0 0.0
    %624 = vmatpush.msra.mxu0 0.0
    %625 = vmatpush.msra.mxu0 0.0
    %626 = vmatpush.msra.mxu0 %v82
    %627 = vmatpush.msra.mxu0 %v81
    %628 = vmatpush.msra.mxu0 %v80
    %629 = vmatpush.msra.mxu0 %v79
    %630 = vmatmul.f32.gmra.mxu0 %v612
    %v631 = vpop.f32.mrf.mxu0
    %v632 = vadd.f32 0.0, %v631
    %633 = vdwg.mxu0
    %v634 = vadd.f32 %v608, %v632
    %v635 = vxor.u32 %v634, 2147483648
    %v636 = vmul.f32 %v635, 1.442695
    %v637 = vpow.pop %v636
    %v638 = vadd.f32 %v637, 1.0
    %v639 = vrcp.pop %v638
    %v640 = vmul.f32 %v638, %v639
    %v641 = vsub.f32 1.0, %v640
    %v642 = vmul.f32 %v639, %v641
    %v643 = vadd.f32 %v639, %v642
    %vm644 = vweird.f32 %v638
    %vm645 = vweird.f32 %v639
    %vm646 = vmor %vm644, %vm645
    %v647 = vsel %vm646, %v639, %v643
    %v648 = vand.u32 2147483647, %v638
    %vm649 = vcmp.eq.f32.partialorder %v648, 8.507059e+37
    %v650 = vand.u32 %v638, 2147483648
    %v651 = vor.u32 1.1754944e-38, %v650
    %v652 = vsel %vm649, %v651, %v647
    %v653 = vmul.f32 1.0, %v652
    %v654 = vtanh.pop %v634
    %655 = vrot.lane.b32.xlu0 %v654, 64
    %v656 = vpop.permute.xlu0 %655
    %v657 = vmul.f32 %v653, %v656
    %v658 = vmul.f32 %v653, %v439
    %660 = vrot.lane.b32.xlu0 %v657, 32
    %v661 = vpop.permute.xlu0 %660
    %v663 = vadd.f32 %v658, %v661
    %v664 = vtanh.pop %v663
    %666 = vrot.lane.b32.xlu0 %v664, 64
    %v667 = vpop.permute.xlu0 %666
    %v669 = vmul.f32 %v653, %v667
    %670 = vmatpush.msra.mxu0 0.0
    %671 = vmatpush.msra.mxu0 0.0
    %672 = vmatpush.msra.mxu0 0.0
    %673 = vmatpush.msra.mxu0 0.0
    %674 = vmatpush.msra.mxu0 0.0
    %675 = vmatpush.msra.mxu0 0.0
    %676 = vmatpush.msra.mxu0 0.0
    %677 = vmatpush.msra.mxu0 0.0
    %678 = vmatpush.msra.mxu0 0.0
    %679 = vmatpush.msra.mxu0 0.0
    %680 = vmatpush.msra.mxu0 0.0
    %681 = vmatpush.msra.mxu0 0.0
    %682 = vmatpush.msra.mxu0 %v74
    %683 = vmatpush.msra.mxu0 %v73
    %684 = vmatpush.msra.mxu0 %v72
    %685 = vmatpush.msra.mxu0 %v71
    %686 = vmatmul.f32.gmra.mxu0 %v612
    %v687 = vpop.f32.mrf.mxu0
    %v688 = vadd.f32 %v95, %v687
    %689 = vdwg.mxu0
    %691 = vrot.lane.b32.xlu0 %v526, 32
    %v692 = vpop.permute.xlu0 %691
    %v693 = vsel %vm186, %v692, 0
    %695 = vmatpush.msra.mxu0 0.0
    %696 = vmatpush.msra.mxu0 0.0
    %697 = vmatpush.msra.mxu0 0.0
    %698 = vmatpush.msra.mxu0 0.0
    %699 = vmatpush.msra.mxu0 0.0
    %700 = vmatpush.msra.mxu0 0.0
    %701 = vmatpush.msra.mxu0 0.0
    %702 = vmatpush.msra.mxu0 0.0
    %703 = vmatpush.msra.mxu0 0.0
    %704 = vmatpush.msra.mxu0 0.0
    %705 = vmatpush.msra.mxu0 0.0
    %706 = vmatpush.msra.mxu0 0.0
    %707 = vmatpush.msra.mxu0 %v86
    %708 = vmatpush.msra.mxu0 %v85
    %709 = vmatpush.msra.mxu0 %v84
    %710 = vmatpush.msra.mxu0 %v83
    %711 = vmatmul.f32.gmra.mxu0 %v693
    %v712 = vpop.f32.mrf.mxu0
    %v713 = vadd.f32 0.0, %v712
    %714 = vdwg.mxu0
    %v715 = vadd.f32 %v688, %v713
    %v716 = vxor.u32 %v715, 2147483648
    %v717 = vmul.f32 %v716, 1.442695
    %v718 = vpow.pop %v717
    %v719 = vadd.f32 %v718, 1.0
    %v720 = vrcp.pop %v719
    %v721 = vmul.f32 %v719, %v720
    %v722 = vsub.f32 1.0, %v721
    %v723 = vmul.f32 %v720, %v722
    %v724 = vadd.f32 %v720, %v723
    %vm725 = vweird.f32 %v719
    %vm726 = vweird.f32 %v720
    %vm727 = vmor %vm725, %vm726
    %v728 = vsel %vm727, %v720, %v724
    %v729 = vand.u32 2147483647, %v719
    %vm730 = vcmp.eq.f32.partialorder %v729, 8.507059e+37
    %v731 = vand.u32 %v719, 2147483648
    %v732 = vor.u32 1.1754944e-38, %v731
    %v733 = vsel %vm730, %v732, %v728
    %v734 = vmul.f32 1.0, %v733
    %v735 = vtanh.pop %v715
    %736 = vrot.lane.b32.xlu0 %v735, 64
    %v737 = vpop.permute.xlu0 %736
    %v738 = vmul.f32 %v734, %v737
    %v739 = vmul.f32 %v734, %v520
    %741 = vrot.lane.b32.xlu0 %v738, 32
    %v742 = vpop.permute.xlu0 %741
    %v744 = vadd.f32 %v739, %v742
    %v745 = vtanh.pop %v744
    %747 = vrot.lane.b32.xlu0 %v745, 64
    %v748 = vpop.permute.xlu0 %747
    %v750 = vmul.f32 %v734, %v748
    %751 = vmatpush.msra.mxu0 0.0
    %752 = vmatpush.msra.mxu0 0.0
    %753 = vmatpush.msra.mxu0 0.0
    %754 = vmatpush.msra.mxu0 0.0
    %755 = vmatpush.msra.mxu0 0.0
    %756 = vmatpush.msra.mxu0 0.0
    %757 = vmatpush.msra.mxu0 0.0
    %758 = vmatpush.msra.mxu0 0.0
    %759 = vmatpush.msra.mxu0 0.0
    %760 = vmatpush.msra.mxu0 0.0
    %761 = vmatpush.msra.mxu0 0.0
    %762 = vmatpush.msra.mxu0 0.0
    %763 = vmatpush.msra.mxu0 %v78
    %764 = vmatpush.msra.mxu0 %v77
    %765 = vmatpush.msra.mxu0 %v76
    %766 = vmatpush.msra.mxu0 %v75
    %767 = vmatmul.f32.gmra.mxu0 %v693
    %v768 = vpop.f32.mrf.mxu0
    %v769 = vadd.f32 %v98, %v768
    %770 = vdwg.mxu0
    %v771 = vsel %vm186, %v605, 0
    %773 = vmatpush.msra.mxu0 0.0
    %774 = vmatpush.msra.mxu0 0.0
    %775 = vmatpush.msra.mxu0 0.0
    %776 = vmatpush.msra.mxu0 0.0
    %777 = vmatpush.msra.mxu0 0.0
    %778 = vmatpush.msra.mxu0 0.0
    %779 = vmatpush.msra.mxu0 0.0
    %780 = vmatpush.msra.mxu0 0.0
    %781 = vmatpush.msra.mxu0 0.0
    %782 = vmatpush.msra.mxu0 0.0
    %783 = vmatpush.msra.mxu0 0.0
    %784 = vmatpush.msra.mxu0 0.0
    %785 = vmatpush.msra.mxu0 %v90
    %786 = vmatpush.msra.mxu0 %v89
    %787 = vmatpush.msra.mxu0 %v88
    %788 = vmatpush.msra.mxu0 %v87
    %789 = vmatmul.f32.gmra.mxu0 %v771
    %v790 = vpop.f32.mrf.mxu0
    %v791 = vadd.f32 0.0, %v790
    %792 = vdwg.mxu0
    %v793 = vadd.f32 %v769, %v791
    %v794 = vxor.u32 %v793, 2147483648
    %v795 = vmul.f32 %v794, 1.442695
    %v796 = vpow.pop %v795
    %v797 = vadd.f32 %v796, 1.0
    %v798 = vrcp.pop %v797
    %v799 = vmul.f32 %v797, %v798
    %v800 = vsub.f32 1.0, %v799
    %v801 = vmul.f32 %v798, %v800
    %v802 = vadd.f32 %v798, %v801
    %vm803 = vweird.f32 %v797
    %vm804 = vweird.f32 %v798
    %vm805 = vmor %vm803, %vm804
    %v806 = vsel %vm805, %v798, %v802
    %v807 = vand.u32 2147483647, %v797
    %vm808 = vcmp.eq.f32.partialorder %v807, 8.507059e+37
    %v809 = vand.u32 %v797, 2147483648
    %v810 = vor.u32 1.1754944e-38, %v809
    %v811 = vsel %vm808, %v810, %v806
    %v812 = vmul.f32 1.0, %v811
    %v813 = vtanh.pop %v793
    %814 = vrot.lane.b32.xlu0 %v813, 64
    %v815 = vpop.permute.xlu0 %814
    %v816 = vmul.f32 %v812, %v815
    %v817 = vmul.f32 %v812, %v596
    %819 = vrot.lane.b32.xlu0 %v816, 32
    %v820 = vpop.permute.xlu0 %819
    %v822 = vadd.f32 %v817, %v820
    %v823 = vtanh.pop %v822
    %825 = vrot.lane.b32.xlu0 %v823, 64
    %v826 = vpop.permute.xlu0 %825
    %v828 = vmul.f32 %v812, %v826
    %830 = vrot.lane.b32.xlu0 %v828, 32
    %v831 = vpop.permute.xlu0 %830
    %833 = vst.msk [vmem:[#allocation3 + $0x8] sm:$0xff] %vm186, %v831
    %v834 = vld [vmem:[#allocation2 + $0x20] sm:$0xff]
    %836 = vrot.lane.b32.xlu0 %v669, 32
    %v837 = vpop.permute.xlu0 %836
    %v838 = vsel %vm186, %v837, 0
    %840 = vmatpush.msra.mxu0 0.0
    %841 = vmatpush.msra.mxu0 0.0
    %842 = vmatpush.msra.mxu0 0.0
    %843 = vmatpush.msra.mxu0 0.0
    %844 = vmatpush.msra.mxu0 0.0
    %845 = vmatpush.msra.mxu0 0.0
    %846 = vmatpush.msra.mxu0 0.0
    %847 = vmatpush.msra.mxu0 0.0
    %848 = vmatpush.msra.mxu0 0.0
    %849 = vmatpush.msra.mxu0 0.0
    %850 = vmatpush.msra.mxu0 0.0
    %851 = vmatpush.msra.mxu0 0.0
    %852 = vmatpush.msra.mxu0 %v82
    %853 = vmatpush.msra.mxu0 %v81
    %854 = vmatpush.msra.mxu0 %v80
    %855 = vmatpush.msra.mxu0 %v79
    %856 = vmatmul.f32.gmra.mxu0 %v838
    %v857 = vpop.f32.mrf.mxu0
    %v858 = vadd.f32 0.0, %v857
    %859 = vdwg.mxu0
    %v860 = vadd.f32 %v834, %v858
    %v861 = vxor.u32 %v860, 2147483648
    %v862 = vmul.f32 %v861, 1.442695
    %v863 = vpow.pop %v862
    %v864 = vadd.f32 %v863, 1.0
    %v865 = vrcp.pop %v864
    %v866 = vmul.f32 %v864, %v865
    %v867 = vsub.f32 1.0, %v866
    %v868 = vmul.f32 %v865, %v867
    %v869 = vadd.f32 %v865, %v868
    %vm870 = vweird.f32 %v864
    %vm871 = vweird.f32 %v865
    %vm872 = vmor %vm870, %vm871
    %v873 = vsel %vm872, %v865, %v869
    %v874 = vand.u32 2147483647, %v864
    %vm875 = vcmp.eq.f32.partialorder %v874, 8.507059e+37
    %v876 = vand.u32 %v864, 2147483648
    %v877 = vor.u32 1.1754944e-38, %v876
    %v878 = vsel %vm875, %v877, %v873
    %v879 = vmul.f32 1.0, %v878
    %v880 = vtanh.pop %v860
    %881 = vrot.lane.b32.xlu0 %v880, 64
    %v882 = vpop.permute.xlu0 %881
    %v883 = vmul.f32 %v879, %v882
    %v884 = vmul.f32 %v879, %v663
    %886 = vrot.lane.b32.xlu0 %v883, 32
    %v887 = vpop.permute.xlu0 %886
    %v889 = vadd.f32 %v884, %v887
    %v890 = vtanh.pop %v889
    %892 = vrot.lane.b32.xlu0 %v890, 64
    %v893 = vpop.permute.xlu0 %892
    %v895 = vmul.f32 %v879, %v893
    %896 = vmatpush.msra.mxu0 0.0
    %897 = vmatpush.msra.mxu0 0.0
    %898 = vmatpush.msra.mxu0 0.0
    %899 = vmatpush.msra.mxu0 0.0
    %900 = vmatpush.msra.mxu0 0.0
    %901 = vmatpush.msra.mxu0 0.0
    %902 = vmatpush.msra.mxu0 0.0
    %903 = vmatpush.msra.mxu0 0.0
    %904 = vmatpush.msra.mxu0 0.0
    %905 = vmatpush.msra.mxu0 0.0
    %906 = vmatpush.msra.mxu0 0.0
    %907 = vmatpush.msra.mxu0 0.0
    %908 = vmatpush.msra.mxu0 %v74
    %909 = vmatpush.msra.mxu0 %v73
    %910 = vmatpush.msra.mxu0 %v72
    %911 = vmatpush.msra.mxu0 %v71
    %912 = vmatmul.f32.gmra.mxu0 %v838
    %v913 = vpop.f32.mrf.mxu0
    %v914 = vadd.f32 %v95, %v913
    %915 = vdwg.mxu0
    %917 = vrot.lane.b32.xlu0 %v750, 32
    %v918 = vpop.permute.xlu0 %917
    %v919 = vsel %vm186, %v918, 0
    %921 = vmatpush.msra.mxu0 0.0
    %922 = vmatpush.msra.mxu0 0.0
    %923 = vmatpush.msra.mxu0 0.0
    %924 = vmatpush.msra.mxu0 0.0
    %925 = vmatpush.msra.mxu0 0.0
    %926 = vmatpush.msra.mxu0 0.0
    %927 = vmatpush.msra.mxu0 0.0
    %928 = vmatpush.msra.mxu0 0.0
    %929 = vmatpush.msra.mxu0 0.0
    %930 = vmatpush.msra.mxu0 0.0
    %931 = vmatpush.msra.mxu0 0.0
    %932 = vmatpush.msra.mxu0 0.0
    %933 = vmatpush.msra.mxu0 %v86
    %934 = vmatpush.msra.mxu0 %v85
    %935 = vmatpush.msra.mxu0 %v84
    %936 = vmatpush.msra.mxu0 %v83
    %937 = vmatmul.f32.gmra.mxu0 %v919
    %v938 = vpop.f32.mrf.mxu0
    %v939 = vadd.f32 0.0, %v938
    %940 = vdwg.mxu0
    %v941 = vadd.f32 %v914, %v939
    %v942 = vxor.u32 %v941, 2147483648
    %v943 = vmul.f32 %v942, 1.442695
    %v944 = vpow.pop %v943
    %v945 = vadd.f32 %v944, 1.0
    %v946 = vrcp.pop %v945
    %v947 = vmul.f32 %v945, %v946
    %v948 = vsub.f32 1.0, %v947
    %v949 = vmul.f32 %v946, %v948
    %v950 = vadd.f32 %v946, %v949
    %vm951 = vweird.f32 %v945
    %vm952 = vweird.f32 %v946
    %vm953 = vmor %vm951, %vm952
    %v954 = vsel %vm953, %v946, %v950
    %v955 = vand.u32 2147483647, %v945
    %vm956 = vcmp.eq.f32.partialorder %v955, 8.507059e+37
    %v957 = vand.u32 %v945, 2147483648
    %v958 = vor.u32 1.1754944e-38, %v957
    %v959 = vsel %vm956, %v958, %v954
    %v960 = vmul.f32 1.0, %v959
    %v961 = vtanh.pop %v941
    %962 = vrot.lane.b32.xlu0 %v961, 64
    %v963 = vpop.permute.xlu0 %962
    %v964 = vmul.f32 %v960, %v963
    %v965 = vmul.f32 %v960, %v744
    %967 = vrot.lane.b32.xlu0 %v964, 32
    %v968 = vpop.permute.xlu0 %967
    %v970 = vadd.f32 %v965, %v968
    %v971 = vtanh.pop %v970
    %973 = vrot.lane.b32.xlu0 %v971, 64
    %v974 = vpop.permute.xlu0 %973
    %v976 = vmul.f32 %v960, %v974
    %977 = vmatpush.msra.mxu0 0.0
    %978 = vmatpush.msra.mxu0 0.0
    %979 = vmatpush.msra.mxu0 0.0
    %980 = vmatpush.msra.mxu0 0.0
    %981 = vmatpush.msra.mxu0 0.0
    %982 = vmatpush.msra.mxu0 0.0
    %983 = vmatpush.msra.mxu0 0.0
    %984 = vmatpush.msra.mxu0 0.0
    %985 = vmatpush.msra.mxu0 0.0
    %986 = vmatpush.msra.mxu0 0.0
    %987 = vmatpush.msra.mxu0 0.0
    %988 = vmatpush.msra.mxu0 0.0
    %989 = vmatpush.msra.mxu0 %v78
    %990 = vmatpush.msra.mxu0 %v77
    %991 = vmatpush.msra.mxu0 %v76
    %992 = vmatpush.msra.mxu0 %v75
    %993 = vmatmul.f32.gmra.mxu0 %v919
    %v994 = vpop.f32.mrf.mxu0
    %v995 = vadd.f32 %v98, %v994
    %996 = vdwg.mxu0
    %v997 = vsel %vm186, %v831, 0
    %999 = vmatpush.msra.mxu0 0.0
    %1000 = vmatpush.msra.mxu0 0.0
    %1001 = vmatpush.msra.mxu0 0.0
    %1002 = vmatpush.msra.mxu0 0.0
    %1003 = vmatpush.msra.mxu0 0.0
    %1004 = vmatpush.msra.mxu0 0.0
    %1005 = vmatpush.msra.mxu0 0.0
    %1006 = vmatpush.msra.mxu0 0.0
    %1007 = vmatpush.msra.mxu0 0.0
    %1008 = vmatpush.msra.mxu0 0.0
    %1009 = vmatpush.msra.mxu0 0.0
    %1010 = vmatpush.msra.mxu0 0.0
    %1011 = vmatpush.msra.mxu0 %v90
    %1012 = vmatpush.msra.mxu0 %v89
    %1013 = vmatpush.msra.mxu0 %v88
    %1014 = vmatpush.msra.mxu0 %v87
    %1015 = vmatmul.f32.gmra.mxu0 %v997
    %v1016 = vpop.f32.mrf.mxu0
    %v1017 = vadd.f32 0.0, %v1016
    %1018 = vdwg.mxu0
    %v1019 = vadd.f32 %v995, %v1017
    %v1020 = vxor.u32 %v1019, 2147483648
    %v1021 = vmul.f32 %v1020, 1.442695
    %v1022 = vpow.pop %v1021
    %v1023 = vadd.f32 %v1022, 1.0
    %v1024 = vrcp.pop %v1023
    %v1025 = vmul.f32 %v1023, %v1024
    %v1026 = vsub.f32 1.0, %v1025
    %v1027 = vmul.f32 %v1024, %v1026
    %v1028 = vadd.f32 %v1024, %v1027
    %vm1029 = vweird.f32 %v1023
    %vm1030 = vweird.f32 %v1024
    %vm1031 = vmor %vm1029, %vm1030
    %v1032 = vsel %vm1031, %v1024, %v1028
    %v1033 = vand.u32 2147483647, %v1023
    %vm1034 = vcmp.eq.f32.partialorder %v1033, 8.507059e+37
    %v1035 = vand.u32 %v1023, 2147483648
    %v1036 = vor.u32 1.1754944e-38, %v1035
    %v1037 = vsel %vm1034, %v1036, %v1032
    %v1038 = vmul.f32 1.0, %v1037
    %v1039 = vtanh.pop %v1019
    %1040 = vrot.lane.b32.xlu0 %v1039, 64
    %v1041 = vpop.permute.xlu0 %1040
    %v1042 = vmul.f32 %v1038, %v1041
    %v1043 = vmul.f32 %v1038, %v822
    %1045 = vrot.lane.b32.xlu0 %v1042, 32
    %v1046 = vpop.permute.xlu0 %1045
    %v1048 = vadd.f32 %v1043, %v1046
    %v1049 = vtanh.pop %v1048
    %1051 = vrot.lane.b32.xlu0 %v1049, 64
    %v1052 = vpop.permute.xlu0 %1051
    %v1054 = vmul.f32 %v1038, %v1052
    %1056 = vrot.lane.b32.xlu0 %v1054, 32
    %v1057 = vpop.permute.xlu0 %1056
    %1059 = vst.msk [vmem:[#allocation3 + $0x10] sm:$0xff] %vm186, %v1057
    %v1060 = vld [vmem:[#allocation2 + $0x28] sm:$0xff]
    %1062 = vrot.lane.b32.xlu0 %v895, 32
    %v1063 = vpop.permute.xlu0 %1062
    %v1064 = vsel %vm186, %v1063, 0
    %1066 = vmatpush.msra.mxu0 0.0
    %1067 = vmatpush.msra.mxu0 0.0
    %1068 = vmatpush.msra.mxu0 0.0
    %1069 = vmatpush.msra.mxu0 0.0
    %1070 = vmatpush.msra.mxu0 0.0
    %1071 = vmatpush.msra.mxu0 0.0
    %1072 = vmatpush.msra.mxu0 0.0
    %1073 = vmatpush.msra.mxu0 0.0
    %1074 = vmatpush.msra.mxu0 0.0
    %1075 = vmatpush.msra.mxu0 0.0
    %1076 = vmatpush.msra.mxu0 0.0
    %1077 = vmatpush.msra.mxu0 0.0
    %1078 = vmatpush.msra.mxu0 %v82
    %1079 = vmatpush.msra.mxu0 %v81
    %1080 = vmatpush.msra.mxu0 %v80
    %1081 = vmatpush.msra.mxu0 %v79
    %1082 = vmatmul.f32.gmra.mxu0 %v1064
    %v1083 = vpop.f32.mrf.mxu0
    %v1084 = vadd.f32 0.0, %v1083
    %1085 = vdwg.mxu0
    %v1086 = vadd.f32 %v1060, %v1084
    %v1087 = vxor.u32 %v1086, 2147483648
    %v1088 = vmul.f32 %v1087, 1.442695
    %v1089 = vpow.pop %v1088
    %v1090 = vadd.f32 %v1089, 1.0
    %v1091 = vrcp.pop %v1090
    %v1092 = vmul.f32 %v1090, %v1091
    %v1093 = vsub.f32 1.0, %v1092
    %v1094 = vmul.f32 %v1091, %v1093
    %v1095 = vadd.f32 %v1091, %v1094
    %vm1096 = vweird.f32 %v1090
    %vm1097 = vweird.f32 %v1091
    %vm1098 = vmor %vm1096, %vm1097
    %v1099 = vsel %vm1098, %v1091, %v1095
    %v1100 = vand.u32 2147483647, %v1090
    %vm1101 = vcmp.eq.f32.partialorder %v1100, 8.507059e+37
    %v1102 = vand.u32 %v1090, 2147483648
    %v1103 = vor.u32 1.1754944e-38, %v1102
    %v1104 = vsel %vm1101, %v1103, %v1099
    %v1105 = vmul.f32 1.0, %v1104
    %v1106 = vtanh.pop %v1086
    %1107 = vrot.lane.b32.xlu0 %v1106, 64
    %v1108 = vpop.permute.xlu0 %1107
    %v1109 = vmul.f32 %v1105, %v1108
    %v1110 = vmul.f32 %v1105, %v889
    %1112 = vrot.lane.b32.xlu0 %v1109, 32
    %v1113 = vpop.permute.xlu0 %1112
    %v1115 = vadd.f32 %v1110, %v1113
    %v1116 = vtanh.pop %v1115
    %1118 = vrot.lane.b32.xlu0 %v1116, 64
    %v1119 = vpop.permute.xlu0 %1118
    %v1121 = vmul.f32 %v1105, %v1119
    %1122 = vmatpush.msra.mxu0 0.0
    %1123 = vmatpush.msra.mxu0 0.0
    %1124 = vmatpush.msra.mxu0 0.0
    %1125 = vmatpush.msra.mxu0 0.0
    %1126 = vmatpush.msra.mxu0 0.0
    %1127 = vmatpush.msra.mxu0 0.0
    %1128 = vmatpush.msra.mxu0 0.0
    %1129 = vmatpush.msra.mxu0 0.0
    %1130 = vmatpush.msra.mxu0 0.0
    %1131 = vmatpush.msra.mxu0 0.0
    %1132 = vmatpush.msra.mxu0 0.0
    %1133 = vmatpush.msra.mxu0 0.0
    %1134 = vmatpush.msra.mxu0 %v74
    %1135 = vmatpush.msra.mxu0 %v73
    %1136 = vmatpush.msra.mxu0 %v72
    %1137 = vmatpush.msra.mxu0 %v71
    %1138 = vmatmul.f32.gmra.mxu0 %v1064
    %v1139 = vpop.f32.mrf.mxu0
    %v1140 = vadd.f32 %v95, %v1139
    %1141 = vdwg.mxu0
    %1143 = vrot.lane.b32.xlu0 %v976, 32
    %v1144 = vpop.permute.xlu0 %1143
    %v1145 = vsel %vm186, %v1144, 0
    %1147 = vmatpush.msra.mxu0 0.0
    %1148 = vmatpush.msra.mxu0 0.0
    %1149 = vmatpush.msra.mxu0 0.0
    %1150 = vmatpush.msra.mxu0 0.0
    %1151 = vmatpush.msra.mxu0 0.0
    %1152 = vmatpush.msra.mxu0 0.0
    %1153 = vmatpush.msra.mxu0 0.0
    %1154 = vmatpush.msra.mxu0 0.0
    %1155 = vmatpush.msra.mxu0 0.0
    %1156 = vmatpush.msra.mxu0 0.0
    %1157 = vmatpush.msra.mxu0 0.0
    %1158 = vmatpush.msra.mxu0 0.0
    %1159 = vmatpush.msra.mxu0 %v86
    %1160 = vmatpush.msra.mxu0 %v85
    %1161 = vmatpush.msra.mxu0 %v84
    %1162 = vmatpush.msra.mxu0 %v83
    %1163 = vmatmul.f32.gmra.mxu0 %v1145
    %v1164 = vpop.f32.mrf.mxu0
    %v1165 = vadd.f32 0.0, %v1164
    %1166 = vdwg.mxu0
    %v1167 = vadd.f32 %v1140, %v1165
    %v1168 = vxor.u32 %v1167, 2147483648
    %v1169 = vmul.f32 %v1168, 1.442695
    %v1170 = vpow.pop %v1169
    %v1171 = vadd.f32 %v1170, 1.0
    %v1172 = vrcp.pop %v1171
    %v1173 = vmul.f32 %v1171, %v1172
    %v1174 = vsub.f32 1.0, %v1173
    %v1175 = vmul.f32 %v1172, %v1174
    %v1176 = vadd.f32 %v1172, %v1175
    %vm1177 = vweird.f32 %v1171
    %vm1178 = vweird.f32 %v1172
    %vm1179 = vmor %vm1177, %vm1178
    %v1180 = vsel %vm1179, %v1172, %v1176
    %v1181 = vand.u32 2147483647, %v1171
    %vm1182 = vcmp.eq.f32.partialorder %v1181, 8.507059e+37
    %v1183 = vand.u32 %v1171, 2147483648
    %v1184 = vor.u32 1.1754944e-38, %v1183
    %v1185 = vsel %vm1182, %v1184, %v1180
    %v1186 = vmul.f32 1.0, %v1185
    %v1187 = vtanh.pop %v1167
    %1188 = vrot.lane.b32.xlu0 %v1187, 64
    %v1189 = vpop.permute.xlu0 %1188
    %v1190 = vmul.f32 %v1186, %v1189
    %v1191 = vmul.f32 %v1186, %v970
    %1193 = vrot.lane.b32.xlu0 %v1190, 32
    %v1194 = vpop.permute.xlu0 %1193
    %v1196 = vadd.f32 %v1191, %v1194
    %v1197 = vtanh.pop %v1196
    %1199 = vrot.lane.b32.xlu0 %v1197, 64
    %v1200 = vpop.permute.xlu0 %1199
    %v1202 = vmul.f32 %v1186, %v1200
    %1203 = vmatpush.msra.mxu0 0.0
    %1204 = vmatpush.msra.mxu0 0.0
    %1205 = vmatpush.msra.mxu0 0.0
    %1206 = vmatpush.msra.mxu0 0.0
    %1207 = vmatpush.msra.mxu0 0.0
    %1208 = vmatpush.msra.mxu0 0.0
    %1209 = vmatpush.msra.mxu0 0.0
    %1210 = vmatpush.msra.mxu0 0.0
    %1211 = vmatpush.msra.mxu0 0.0
    %1212 = vmatpush.msra.mxu0 0.0
    %1213 = vmatpush.msra.mxu0 0.0
    %1214 = vmatpush.msra.mxu0 0.0
    %1215 = vmatpush.msra.mxu0 %v78
    %1216 = vmatpush.msra.mxu0 %v77
    %1217 = vmatpush.msra.mxu0 %v76
    %1218 = vmatpush.msra.mxu0 %v75
    %1219 = vmatmul.f32.gmra.mxu0 %v1145
    %v1220 = vpop.f32.mrf.mxu0
    %v1221 = vadd.f32 %v98, %v1220
    %1222 = vdwg.mxu0
    %v1223 = vsel %vm186, %v1057, 0
    %1225 = vmatpush.msra.mxu0 0.0
    %1226 = vmatpush.msra.mxu0 0.0
    %1227 = vmatpush.msra.mxu0 0.0
    %1228 = vmatpush.msra.mxu0 0.0
    %1229 = vmatpush.msra.mxu0 0.0
    %1230 = vmatpush.msra.mxu0 0.0
    %1231 = vmatpush.msra.mxu0 0.0
    %1232 = vmatpush.msra.mxu0 0.0
    %1233 = vmatpush.msra.mxu0 0.0
    %1234 = vmatpush.msra.mxu0 0.0
    %1235 = vmatpush.msra.mxu0 0.0
    %1236 = vmatpush.msra.mxu0 0.0
    %1237 = vmatpush.msra.mxu0 %v90
    %1238 = vmatpush.msra.mxu0 %v89
    %1239 = vmatpush.msra.mxu0 %v88
    %1240 = vmatpush.msra.mxu0 %v87
    %1241 = vmatmul.f32.gmra.mxu0 %v1223
    %v1242 = vpop.f32.mrf.mxu0
    %v1243 = vadd.f32 0.0, %v1242
    %1244 = vdwg.mxu0
    %v1245 = vadd.f32 %v1221, %v1243
    %v1246 = vxor.u32 %v1245, 2147483648
    %v1247 = vmul.f32 %v1246, 1.442695
    %v1248 = vpow.pop %v1247
    %v1249 = vadd.f32 %v1248, 1.0
    %v1250 = vrcp.pop %v1249
    %v1251 = vmul.f32 %v1249, %v1250
    %v1252 = vsub.f32 1.0, %v1251
    %v1253 = vmul.f32 %v1250, %v1252
    %v1254 = vadd.f32 %v1250, %v1253
    %vm1255 = vweird.f32 %v1249
    %vm1256 = vweird.f32 %v1250
    %vm1257 = vmor %vm1255, %vm1256
    %v1258 = vsel %vm1257, %v1250, %v1254
    %v1259 = vand.u32 2147483647, %v1249
    %vm1260 = vcmp.eq.f32.partialorder %v1259, 8.507059e+37
    %v1261 = vand.u32 %v1249, 2147483648
    %v1262 = vor.u32 1.1754944e-38, %v1261
    %v1263 = vsel %vm1260, %v1262, %v1258
    %v1264 = vmul.f32 1.0, %v1263
    %v1265 = vtanh.pop %v1245
    %1266 = vrot.lane.b32.xlu0 %v1265, 64
    %v1267 = vpop.permute.xlu0 %1266
    %v1268 = vmul.f32 %v1264, %v1267
    %v1269 = vmul.f32 %v1264, %v1048
    %1271 = vrot.lane.b32.xlu0 %v1268, 32
    %v1272 = vpop.permute.xlu0 %1271
    %v1274 = vadd.f32 %v1269, %v1272
    %v1275 = vtanh.pop %v1274
    %1277 = vrot.lane.b32.xlu0 %v1275, 64
    %v1278 = vpop.permute.xlu0 %1277
    %v1280 = vmul.f32 %v1264, %v1278
    %1282 = vrot.lane.b32.xlu0 %v1280, 32
    %v1283 = vpop.permute.xlu0 %1282
    %1285 = vst.msk [vmem:[#allocation3 + $0x18] sm:$0xff] %vm186, %v1283
    %v1286 = vld [vmem:[#allocation2 + $0x30] sm:$0xff]
    %1288 = vrot.lane.b32.xlu0 %v1121, 32
    %v1289 = vpop.permute.xlu0 %1288
    %v1290 = vsel %vm186, %v1289, 0
    %1292 = vmatpush.msra.mxu0 0.0
    %1293 = vmatpush.msra.mxu0 0.0
    %1294 = vmatpush.msra.mxu0 0.0
    %1295 = vmatpush.msra.mxu0 0.0
    %1296 = vmatpush.msra.mxu0 0.0
    %1297 = vmatpush.msra.mxu0 0.0
    %1298 = vmatpush.msra.mxu0 0.0
    %1299 = vmatpush.msra.mxu0 0.0
    %1300 = vmatpush.msra.mxu0 0.0
    %1301 = vmatpush.msra.mxu0 0.0
    %1302 = vmatpush.msra.mxu0 0.0
    %1303 = vmatpush.msra.mxu0 0.0
    %1304 = vmatpush.msra.mxu0 %v82
    %1305 = vmatpush.msra.mxu0 %v81
    %1306 = vmatpush.msra.mxu0 %v80
    %1307 = vmatpush.msra.mxu0 %v79
    %1308 = vmatmul.f32.gmra.mxu0 %v1290
    %v1309 = vpop.f32.mrf.mxu0
    %v1310 = vadd.f32 0.0, %v1309
    %1311 = vdwg.mxu0
    %v1312 = vadd.f32 %v1286, %v1310
    %v1313 = vxor.u32 %v1312, 2147483648
    %v1314 = vmul.f32 %v1313, 1.442695
    %v1315 = vpow.pop %v1314
    %v1316 = vadd.f32 %v1315, 1.0
    %v1317 = vrcp.pop %v1316
    %v1318 = vmul.f32 %v1316, %v1317
    %v1319 = vsub.f32 1.0, %v1318
    %v1320 = vmul.f32 %v1317, %v1319
    %v1321 = vadd.f32 %v1317, %v1320
    %vm1322 = vweird.f32 %v1316
    %vm1323 = vweird.f32 %v1317
    %vm1324 = vmor %vm1322, %vm1323
    %v1325 = vsel %vm1324, %v1317, %v1321
    %v1326 = vand.u32 2147483647, %v1316
    %vm1327 = vcmp.eq.f32.partialorder %v1326, 8.507059e+37
    %v1328 = vand.u32 %v1316, 2147483648
    %v1329 = vor.u32 1.1754944e-38, %v1328
    %v1330 = vsel %vm1327, %v1329, %v1325
    %v1331 = vmul.f32 1.0, %v1330
    %v1332 = vtanh.pop %v1312
    %1333 = vrot.lane.b32.xlu0 %v1332, 64
    %v1334 = vpop.permute.xlu0 %1333
    %v1335 = vmul.f32 %v1331, %v1334
    %v1336 = vmul.f32 %v1331, %v1115
    %1338 = vrot.lane.b32.xlu0 %v1335, 32
    %v1339 = vpop.permute.xlu0 %1338
    %v1341 = vadd.f32 %v1336, %v1339
    %v1342 = vtanh.pop %v1341
    %1344 = vrot.lane.b32.xlu0 %v1342, 64
    %v1345 = vpop.permute.xlu0 %1344
    %v1347 = vmul.f32 %v1331, %v1345
    %1348 = vmatpush.msra.mxu0 0.0
    %1349 = vmatpush.msra.mxu0 0.0
    %1350 = vmatpush.msra.mxu0 0.0
    %1351 = vmatpush.msra.mxu0 0.0
    %1352 = vmatpush.msra.mxu0 0.0
    %1353 = vmatpush.msra.mxu0 0.0
    %1354 = vmatpush.msra.mxu0 0.0
    %1355 = vmatpush.msra.mxu0 0.0
    %1356 = vmatpush.msra.mxu0 0.0
    %1357 = vmatpush.msra.mxu0 0.0
    %1358 = vmatpush.msra.mxu0 0.0
    %1359 = vmatpush.msra.mxu0 0.0
    %1360 = vmatpush.msra.mxu0 %v74
    %1361 = vmatpush.msra.mxu0 %v73
    %1362 = vmatpush.msra.mxu0 %v72
    %1363 = vmatpush.msra.mxu0 %v71
    %1364 = vmatmul.f32.gmra.mxu0 %v1290
    %v1365 = vpop.f32.mrf.mxu0
    %v1366 = vadd.f32 %v95, %v1365
    %1367 = vdwg.mxu0
    %1369 = vrot.lane.b32.xlu0 %v1202, 32
    %v1370 = vpop.permute.xlu0 %1369
    %v1371 = vsel %vm186, %v1370, 0
    %1373 = vmatpush.msra.mxu0 0.0
    %1374 = vmatpush.msra.mxu0 0.0
    %1375 = vmatpush.msra.mxu0 0.0
    %1376 = vmatpush.msra.mxu0 0.0
    %1377 = vmatpush.msra.mxu0 0.0
    %1378 = vmatpush.msra.mxu0 0.0
    %1379 = vmatpush.msra.mxu0 0.0
    %1380 = vmatpush.msra.mxu0 0.0
    %1381 = vmatpush.msra.mxu0 0.0
    %1382 = vmatpush.msra.mxu0 0.0
    %1383 = vmatpush.msra.mxu0 0.0
    %1384 = vmatpush.msra.mxu0 0.0
    %1385 = vmatpush.msra.mxu0 %v86
    %1386 = vmatpush.msra.mxu0 %v85
    %1387 = vmatpush.msra.mxu0 %v84
    %1388 = vmatpush.msra.mxu0 %v83
    %1389 = vmatmul.f32.gmra.mxu0 %v1371
    %v1390 = vpop.f32.mrf.mxu0
    %v1391 = vadd.f32 0.0, %v1390
    %1392 = vdwg.mxu0
    %v1393 = vadd.f32 %v1366, %v1391
    %v1394 = vxor.u32 %v1393, 2147483648
    %v1395 = vmul.f32 %v1394, 1.442695
    %v1396 = vpow.pop %v1395
    %v1397 = vadd.f32 %v1396, 1.0
    %v1398 = vrcp.pop %v1397
    %v1399 = vmul.f32 %v1397, %v1398
    %v1400 = vsub.f32 1.0, %v1399
    %v1401 = vmul.f32 %v1398, %v1400
    %v1402 = vadd.f32 %v1398, %v1401
    %vm1403 = vweird.f32 %v1397
    %vm1404 = vweird.f32 %v1398
    %vm1405 = vmor %vm1403, %vm1404
    %v1406 = vsel %vm1405, %v1398, %v1402
    %v1407 = vand.u32 2147483647, %v1397
    %vm1408 = vcmp.eq.f32.partialorder %v1407, 8.507059e+37
    %v1409 = vand.u32 %v1397, 2147483648
    %v1410 = vor.u32 1.1754944e-38, %v1409
    %v1411 = vsel %vm1408, %v1410, %v1406
    %v1412 = vmul.f32 1.0, %v1411
    %v1413 = vtanh.pop %v1393
    %1414 = vrot.lane.b32.xlu0 %v1413, 64
    %v1415 = vpop.permute.xlu0 %1414
    %v1416 = vmul.f32 %v1412, %v1415
    %v1417 = vmul.f32 %v1412, %v1196
    %1419 = vrot.lane.b32.xlu0 %v1416, 32
    %v1420 = vpop.permute.xlu0 %1419
    %v1422 = vadd.f32 %v1417, %v1420
    %v1423 = vtanh.pop %v1422
    %1425 = vrot.lane.b32.xlu0 %v1423, 64
    %v1426 = vpop.permute.xlu0 %1425
    %v1428 = vmul.f32 %v1412, %v1426
    %1429 = vmatpush.msra.mxu0 0.0
    %1430 = vmatpush.msra.mxu0 0.0
    %1431 = vmatpush.msra.mxu0 0.0
    %1432 = vmatpush.msra.mxu0 0.0
    %1433 = vmatpush.msra.mxu0 0.0
    %1434 = vmatpush.msra.mxu0 0.0
    %1435 = vmatpush.msra.mxu0 0.0
    %1436 = vmatpush.msra.mxu0 0.0
    %1437 = vmatpush.msra.mxu0 0.0
    %1438 = vmatpush.msra.mxu0 0.0
    %1439 = vmatpush.msra.mxu0 0.0
    %1440 = vmatpush.msra.mxu0 0.0
    %1441 = vmatpush.msra.mxu0 %v78
    %1442 = vmatpush.msra.mxu0 %v77
    %1443 = vmatpush.msra.mxu0 %v76
    %1444 = vmatpush.msra.mxu0 %v75
    %1445 = vmatmul.f32.gmra.mxu0 %v1371
    %v1446 = vpop.f32.mrf.mxu0
    %v1447 = vadd.f32 %v98, %v1446
    %1448 = vdwg.mxu0
    %v1449 = vsel %vm186, %v1283, 0
    %1451 = vmatpush.msra.mxu0 0.0
    %1452 = vmatpush.msra.mxu0 0.0
    %1453 = vmatpush.msra.mxu0 0.0
    %1454 = vmatpush.msra.mxu0 0.0
    %1455 = vmatpush.msra.mxu0 0.0
    %1456 = vmatpush.msra.mxu0 0.0
    %1457 = vmatpush.msra.mxu0 0.0
    %1458 = vmatpush.msra.mxu0 0.0
    %1459 = vmatpush.msra.mxu0 0.0
    %1460 = vmatpush.msra.mxu0 0.0
    %1461 = vmatpush.msra.mxu0 0.0
    %1462 = vmatpush.msra.mxu0 0.0
    %1463 = vmatpush.msra.mxu0 %v90
    %1464 = vmatpush.msra.mxu0 %v89
    %1465 = vmatpush.msra.mxu0 %v88
    %1466 = vmatpush.msra.mxu0 %v87
    %1467 = vmatmul.f32.gmra.mxu0 %v1449
    %v1468 = vpop.f32.mrf.mxu0
    %v1469 = vadd.f32 0.0, %v1468
    %1470 = vdwg.mxu0
    %v1471 = vadd.f32 %v1447, %v1469
    %v1472 = vxor.u32 %v1471, 2147483648
    %v1473 = vmul.f32 %v1472, 1.442695
    %v1474 = vpow.pop %v1473
    %v1475 = vadd.f32 %v1474, 1.0
    %v1476 = vrcp.pop %v1475
    %v1477 = vmul.f32 %v1475, %v1476
    %v1478 = vsub.f32 1.0, %v1477
    %v1479 = vmul.f32 %v1476, %v1478
    %v1480 = vadd.f32 %v1476, %v1479
    %vm1481 = vweird.f32 %v1475
    %vm1482 = vweird.f32 %v1476
    %vm1483 = vmor %vm1481, %vm1482
    %v1484 = vsel %vm1483, %v1476, %v1480
    %v1485 = vand.u32 2147483647, %v1475
    %vm1486 = vcmp.eq.f32.partialorder %v1485, 8.507059e+37
    %v1487 = vand.u32 %v1475, 2147483648
    %v1488 = vor.u32 1.1754944e-38, %v1487
    %v1489 = vsel %vm1486, %v1488, %v1484
    %v1490 = vmul.f32 1.0, %v1489
    %v1491 = vtanh.pop %v1471
    %1492 = vrot.lane.b32.xlu0 %v1491, 64
    %v1493 = vpop.permute.xlu0 %1492
    %v1494 = vmul.f32 %v1490, %v1493
    %v1495 = vmul.f32 %v1490, %v1274
    %1497 = vrot.lane.b32.xlu0 %v1494, 32
    %v1498 = vpop.permute.xlu0 %1497
    %v1500 = vadd.f32 %v1495, %v1498
    %v1501 = vtanh.pop %v1500
    %1503 = vrot.lane.b32.xlu0 %v1501, 64
    %v1504 = vpop.permute.xlu0 %1503
    %v1506 = vmul.f32 %v1490, %v1504
    %1508 = vrot.lane.b32.xlu0 %v1506, 32
    %v1509 = vpop.permute.xlu0 %1508
    %1511 = vst.msk [vmem:[#allocation3 + $0x20] sm:$0xff] %vm186, %v1509
    %v1512 = vld [vmem:[#allocation2 + $0x38] sm:$0xff]
    %1514 = vrot.lane.b32.xlu0 %v1347, 32
    %v1515 = vpop.permute.xlu0 %1514
    %v1516 = vsel %vm186, %v1515, 0
    %1518 = vmatpush.msra.mxu0 0.0
    %1519 = vmatpush.msra.mxu0 0.0
    %1520 = vmatpush.msra.mxu0 0.0
    %1521 = vmatpush.msra.mxu0 0.0
    %1522 = vmatpush.msra.mxu0 0.0
    %1523 = vmatpush.msra.mxu0 0.0
    %1524 = vmatpush.msra.mxu0 0.0
    %1525 = vmatpush.msra.mxu0 0.0
    %1526 = vmatpush.msra.mxu0 0.0
    %1527 = vmatpush.msra.mxu0 0.0
    %1528 = vmatpush.msra.mxu0 0.0
    %1529 = vmatpush.msra.mxu0 0.0
    %1530 = vmatpush.msra.mxu0 %v82
    %1531 = vmatpush.msra.mxu0 %v81
    %1532 = vmatpush.msra.mxu0 %v80
    %1533 = vmatpush.msra.mxu0 %v79
    %1534 = vmatmul.f32.gmra.mxu0 %v1516
    %v1535 = vpop.f32.mrf.mxu0
    %v1536 = vadd.f32 0.0, %v1535
    %1537 = vdwg.mxu0
    %v1538 = vadd.f32 %v1512, %v1536
    %v1539 = vxor.u32 %v1538, 2147483648
    %v1540 = vmul.f32 %v1539, 1.442695
    %v1541 = vpow.pop %v1540
    %v1542 = vadd.f32 %v1541, 1.0
    %v1543 = vrcp.pop %v1542
    %v1544 = vmul.f32 %v1542, %v1543
    %v1545 = vsub.f32 1.0, %v1544
    %v1546 = vmul.f32 %v1543, %v1545
    %v1547 = vadd.f32 %v1543, %v1546
    %vm1548 = vweird.f32 %v1542
    %vm1549 = vweird.f32 %v1543
    %vm1550 = vmor %vm1548, %vm1549
    %v1551 = vsel %vm1550, %v1543, %v1547
    %v1552 = vand.u32 2147483647, %v1542
    %vm1553 = vcmp.eq.f32.partialorder %v1552, 8.507059e+37
    %v1554 = vand.u32 %v1542, 2147483648
    %v1555 = vor.u32 1.1754944e-38, %v1554
    %v1556 = vsel %vm1553, %v1555, %v1551
    %v1557 = vmul.f32 1.0, %v1556
    %v1558 = vtanh.pop %v1538
    %1559 = vrot.lane.b32.xlu0 %v1558, 64
    %v1560 = vpop.permute.xlu0 %1559
    %v1561 = vmul.f32 %v1557, %v1560
    %v1562 = vmul.f32 %v1557, %v1341
    %1564 = vrot.lane.b32.xlu0 %v1561, 32
    %v1565 = vpop.permute.xlu0 %1564
    %v1567 = vadd.f32 %v1562, %v1565
    %v1568 = vtanh.pop %v1567
    %1570 = vrot.lane.b32.xlu0 %v1568, 64
    %v1571 = vpop.permute.xlu0 %1570
    %v1573 = vmul.f32 %v1557, %v1571
    %1574 = vmatpush.msra.mxu0 0.0
    %1575 = vmatpush.msra.mxu0 0.0
    %1576 = vmatpush.msra.mxu0 0.0
    %1577 = vmatpush.msra.mxu0 0.0
    %1578 = vmatpush.msra.mxu0 0.0
    %1579 = vmatpush.msra.mxu0 0.0
    %1580 = vmatpush.msra.mxu0 0.0
    %1581 = vmatpush.msra.mxu0 0.0
    %1582 = vmatpush.msra.mxu0 0.0
    %1583 = vmatpush.msra.mxu0 0.0
    %1584 = vmatpush.msra.mxu0 0.0
    %1585 = vmatpush.msra.mxu0 0.0
    %1586 = vmatpush.msra.mxu0 %v74
    %1587 = vmatpush.msra.mxu0 %v73
    %1588 = vmatpush.msra.mxu0 %v72
    %1589 = vmatpush.msra.mxu0 %v71
    %1590 = vmatmul.f32.gmra.mxu0 %v1516
    %v1591 = vpop.f32.mrf.mxu0
    %v1592 = vadd.f32 %v95, %v1591
    %1593 = vdwg.mxu0
    %1595 = vrot.lane.b32.xlu0 %v1428, 32
    %v1596 = vpop.permute.xlu0 %1595
    %v1597 = vsel %vm186, %v1596, 0
    %1599 = vmatpush.msra.mxu0 0.0
    %1600 = vmatpush.msra.mxu0 0.0
    %1601 = vmatpush.msra.mxu0 0.0
    %1602 = vmatpush.msra.mxu0 0.0
    %1603 = vmatpush.msra.mxu0 0.0
    %1604 = vmatpush.msra.mxu0 0.0
    %1605 = vmatpush.msra.mxu0 0.0
    %1606 = vmatpush.msra.mxu0 0.0
    %1607 = vmatpush.msra.mxu0 0.0
    %1608 = vmatpush.msra.mxu0 0.0
    %1609 = vmatpush.msra.mxu0 0.0
    %1610 = vmatpush.msra.mxu0 0.0
    %1611 = vmatpush.msra.mxu0 %v86
    %1612 = vmatpush.msra.mxu0 %v85
    %1613 = vmatpush.msra.mxu0 %v84
    %1614 = vmatpush.msra.mxu0 %v83
    %1615 = vmatmul.f32.gmra.mxu0 %v1597
    %v1616 = vpop.f32.mrf.mxu0
    %v1617 = vadd.f32 0.0, %v1616
    %1618 = vdwg.mxu0
    %v1619 = vadd.f32 %v1592, %v1617
    %v1620 = vxor.u32 %v1619, 2147483648
    %v1621 = vmul.f32 %v1620, 1.442695
    %v1622 = vpow.pop %v1621
    %v1623 = vadd.f32 %v1622, 1.0
    %v1624 = vrcp.pop %v1623
    %v1625 = vmul.f32 %v1623, %v1624
    %v1626 = vsub.f32 1.0, %v1625
    %v1627 = vmul.f32 %v1624, %v1626
    %v1628 = vadd.f32 %v1624, %v1627
    %vm1629 = vweird.f32 %v1623
    %vm1630 = vweird.f32 %v1624
    %vm1631 = vmor %vm1629, %vm1630
    %v1632 = vsel %vm1631, %v1624, %v1628
    %v1633 = vand.u32 2147483647, %v1623
    %vm1634 = vcmp.eq.f32.partialorder %v1633, 8.507059e+37
    %v1635 = vand.u32 %v1623, 2147483648
    %v1636 = vor.u32 1.1754944e-38, %v1635
    %v1637 = vsel %vm1634, %v1636, %v1632
    %v1638 = vmul.f32 1.0, %v1637
    %v1639 = vtanh.pop %v1619
    %1640 = vrot.lane.b32.xlu0 %v1639, 64
    %v1641 = vpop.permute.xlu0 %1640
    %v1642 = vmul.f32 %v1638, %v1641
    %v1643 = vmul.f32 %v1638, %v1422
    %1645 = vrot.lane.b32.xlu0 %v1642, 32
    %v1646 = vpop.permute.xlu0 %1645
    %v1648 = vadd.f32 %v1643, %v1646
    %v1649 = vtanh.pop %v1648
    %1651 = vrot.lane.b32.xlu0 %v1649, 64
    %v1652 = vpop.permute.xlu0 %1651
    %v1654 = vmul.f32 %v1638, %v1652
    %1655 = vmatpush.msra.mxu0 0.0
    %1656 = vmatpush.msra.mxu0 0.0
    %1657 = vmatpush.msra.mxu0 0.0
    %1658 = vmatpush.msra.mxu0 0.0
    %1659 = vmatpush.msra.mxu0 0.0
    %1660 = vmatpush.msra.mxu0 0.0
    %1661 = vmatpush.msra.mxu0 0.0
    %1662 = vmatpush.msra.mxu0 0.0
    %1663 = vmatpush.msra.mxu0 0.0
    %1664 = vmatpush.msra.mxu0 0.0
    %1665 = vmatpush.msra.mxu0 0.0
    %1666 = vmatpush.msra.mxu0 0.0
    %1667 = vmatpush.msra.mxu0 %v78
    %1668 = vmatpush.msra.mxu0 %v77
    %1669 = vmatpush.msra.mxu0 %v76
    %1670 = vmatpush.msra.mxu0 %v75
    %1671 = vmatmul.f32.gmra.mxu0 %v1597
    %v1672 = vpop.f32.mrf.mxu0
    %v1673 = vadd.f32 %v98, %v1672
    %1674 = vdwg.mxu0
    %v1675 = vsel %vm186, %v1509, 0
    %1677 = vmatpush.msra.mxu0 0.0
    %1678 = vmatpush.msra.mxu0 0.0
    %1679 = vmatpush.msra.mxu0 0.0
    %1680 = vmatpush.msra.mxu0 0.0
    %1681 = vmatpush.msra.mxu0 0.0
    %1682 = vmatpush.msra.mxu0 0.0
    %1683 = vmatpush.msra.mxu0 0.0
    %1684 = vmatpush.msra.mxu0 0.0
    %1685 = vmatpush.msra.mxu0 0.0
    %1686 = vmatpush.msra.mxu0 0.0
    %1687 = vmatpush.msra.mxu0 0.0
    %1688 = vmatpush.msra.mxu0 0.0
    %1689 = vmatpush.msra.mxu0 %v90
    %1690 = vmatpush.msra.mxu0 %v89
    %1691 = vmatpush.msra.mxu0 %v88
    %1692 = vmatpush.msra.mxu0 %v87
    %1693 = vmatmul.f32.gmra.mxu0 %v1675
    %v1694 = vpop.f32.mrf.mxu0
    %v1695 = vadd.f32 0.0, %v1694
    %1696 = vdwg.mxu0
    %v1697 = vadd.f32 %v1673, %v1695
    %v1698 = vxor.u32 %v1697, 2147483648
    %v1699 = vmul.f32 %v1698, 1.442695
    %v1700 = vpow.pop %v1699
    %v1701 = vadd.f32 %v1700, 1.0
    %v1702 = vrcp.pop %v1701
    %v1703 = vmul.f32 %v1701, %v1702
    %v1704 = vsub.f32 1.0, %v1703
    %v1705 = vmul.f32 %v1702, %v1704
    %v1706 = vadd.f32 %v1702, %v1705
    %vm1707 = vweird.f32 %v1701
    %vm1708 = vweird.f32 %v1702
    %vm1709 = vmor %vm1707, %vm1708
    %v1710 = vsel %vm1709, %v1702, %v1706
    %v1711 = vand.u32 2147483647, %v1701
    %vm1712 = vcmp.eq.f32.partialorder %v1711, 8.507059e+37
    %v1713 = vand.u32 %v1701, 2147483648
    %v1714 = vor.u32 1.1754944e-38, %v1713
    %v1715 = vsel %vm1712, %v1714, %v1710
    %v1716 = vmul.f32 1.0, %v1715
    %v1717 = vtanh.pop %v1697
    %1718 = vrot.lane.b32.xlu0 %v1717, 64
    %v1719 = vpop.permute.xlu0 %1718
    %v1720 = vmul.f32 %v1716, %v1719
    %v1721 = vmul.f32 %v1716, %v1500
    %1723 = vrot.lane.b32.xlu0 %v1720, 32
    %v1724 = vpop.permute.xlu0 %1723
    %v1726 = vadd.f32 %v1721, %v1724
    %v1727 = vtanh.pop %v1726
    %1729 = vrot.lane.b32.xlu0 %v1727, 64
    %v1730 = vpop.permute.xlu0 %1729
    %v1732 = vmul.f32 %v1716, %v1730
    %1734 = vrot.lane.b32.xlu0 %v1732, 32
    %v1735 = vpop.permute.xlu0 %1734
    %1737 = vst.msk [vmem:[#allocation3 + $0x28] sm:$0xff] %vm186, %v1735
    %1739 = vrot.lane.b32.xlu0 %v1573, 32
    %v1740 = vpop.permute.xlu0 %1739
    %v1741 = vsel %vm186, %v1740, 0
    %1743 = vmatpush.msra.mxu0 0.0
    %1744 = vmatpush.msra.mxu0 0.0
    %1745 = vmatpush.msra.mxu0 0.0
    %1746 = vmatpush.msra.mxu0 0.0
    %1747 = vmatpush.msra.mxu0 0.0
    %1748 = vmatpush.msra.mxu0 0.0
    %1749 = vmatpush.msra.mxu0 0.0
    %1750 = vmatpush.msra.mxu0 0.0
    %1751 = vmatpush.msra.mxu0 0.0
    %1752 = vmatpush.msra.mxu0 0.0
    %1753 = vmatpush.msra.mxu0 0.0
    %1754 = vmatpush.msra.mxu0 0.0
    %1755 = vmatpush.msra.mxu0 %v74
    %1756 = vmatpush.msra.mxu0 %v73
    %1757 = vmatpush.msra.mxu0 %v72
    %1758 = vmatpush.msra.mxu0 %v71
    %1759 = vmatmul.f32.gmra.mxu0 %v1741
    %v1760 = vpop.f32.mrf.mxu0
    %v1761 = vadd.f32 %v95, %v1760
    %1762 = vdwg.mxu0
    %1764 = vrot.lane.b32.xlu0 %v1654, 32
    %v1765 = vpop.permute.xlu0 %1764
    %v1766 = vsel %vm186, %v1765, 0
    %1768 = vmatpush.msra.mxu0 0.0
    %1769 = vmatpush.msra.mxu0 0.0
    %1770 = vmatpush.msra.mxu0 0.0
    %1771 = vmatpush.msra.mxu0 0.0
    %1772 = vmatpush.msra.mxu0 0.0
    %1773 = vmatpush.msra.mxu0 0.0
    %1774 = vmatpush.msra.mxu0 0.0
    %1775 = vmatpush.msra.mxu0 0.0
    %1776 = vmatpush.msra.mxu0 0.0
    %1777 = vmatpush.msra.mxu0 0.0
    %1778 = vmatpush.msra.mxu0 0.0
    %1779 = vmatpush.msra.mxu0 0.0
    %1780 = vmatpush.msra.mxu0 %v86
    %1781 = vmatpush.msra.mxu0 %v85
    %1782 = vmatpush.msra.mxu0 %v84
    %1783 = vmatpush.msra.mxu0 %v83
    %1784 = vmatmul.f32.gmra.mxu0 %v1766
    %v1785 = vpop.f32.mrf.mxu0
    %v1786 = vadd.f32 0.0, %v1785
    %1787 = vdwg.mxu0
    %v1788 = vadd.f32 %v1761, %v1786
    %v1789 = vxor.u32 %v1788, 2147483648
    %v1790 = vmul.f32 %v1789, 1.442695
    %v1791 = vpow.pop %v1790
    %v1792 = vadd.f32 %v1791, 1.0
    %v1793 = vrcp.pop %v1792
    %v1794 = vmul.f32 %v1792, %v1793
    %v1795 = vsub.f32 1.0, %v1794
    %v1796 = vmul.f32 %v1793, %v1795
    %v1797 = vadd.f32 %v1793, %v1796
    %vm1798 = vweird.f32 %v1792
    %vm1799 = vweird.f32 %v1793
    %vm1800 = vmor %vm1798, %vm1799
    %v1801 = vsel %vm1800, %v1793, %v1797
    %v1802 = vand.u32 2147483647, %v1792
    %vm1803 = vcmp.eq.f32.partialorder %v1802, 8.507059e+37
    %v1804 = vand.u32 %v1792, 2147483648
    %v1805 = vor.u32 1.1754944e-38, %v1804
    %v1806 = vsel %vm1803, %v1805, %v1801
    %v1807 = vmul.f32 1.0, %v1806
    %v1808 = vtanh.pop %v1788
    %1809 = vrot.lane.b32.xlu0 %v1808, 64
    %v1810 = vpop.permute.xlu0 %1809
    %v1811 = vmul.f32 %v1807, %v1810
    %v1812 = vmul.f32 %v1807, %v1648
    %1814 = vrot.lane.b32.xlu0 %v1811, 32
    %v1815 = vpop.permute.xlu0 %1814
    %v1817 = vadd.f32 %v1812, %v1815
    %v1818 = vtanh.pop %v1817
    %1820 = vrot.lane.b32.xlu0 %v1818, 64
    %v1821 = vpop.permute.xlu0 %1820
    %v1823 = vmul.f32 %v1807, %v1821
    %1824 = vmatpush.msra.mxu0 0.0
    %1825 = vmatpush.msra.mxu0 0.0
    %1826 = vmatpush.msra.mxu0 0.0
    %1827 = vmatpush.msra.mxu0 0.0
    %1828 = vmatpush.msra.mxu0 0.0
    %1829 = vmatpush.msra.mxu0 0.0
    %1830 = vmatpush.msra.mxu0 0.0
    %1831 = vmatpush.msra.mxu0 0.0
    %1832 = vmatpush.msra.mxu0 0.0
    %1833 = vmatpush.msra.mxu0 0.0
    %1834 = vmatpush.msra.mxu0 0.0
    %1835 = vmatpush.msra.mxu0 0.0
    %1836 = vmatpush.msra.mxu0 %v78
    %1837 = vmatpush.msra.mxu0 %v77
    %1838 = vmatpush.msra.mxu0 %v76
    %1839 = vmatpush.msra.mxu0 %v75
    %1840 = vmatmul.f32.gmra.mxu0 %v1766
    %v1841 = vpop.f32.mrf.mxu0
    %v1842 = vadd.f32 %v98, %v1841
    %1843 = vdwg.mxu0
    %v1844 = vsel %vm186, %v1735, 0
    %1846 = vmatpush.msra.mxu0 0.0
    %1847 = vmatpush.msra.mxu0 0.0
    %1848 = vmatpush.msra.mxu0 0.0
    %1849 = vmatpush.msra.mxu0 0.0
    %1850 = vmatpush.msra.mxu0 0.0
    %1851 = vmatpush.msra.mxu0 0.0
    %1852 = vmatpush.msra.mxu0 0.0
    %1853 = vmatpush.msra.mxu0 0.0
    %1854 = vmatpush.msra.mxu0 0.0
    %1855 = vmatpush.msra.mxu0 0.0
    %1856 = vmatpush.msra.mxu0 0.0
    %1857 = vmatpush.msra.mxu0 0.0
    %1858 = vmatpush.msra.mxu0 %v90
    %1859 = vmatpush.msra.mxu0 %v89
    %1860 = vmatpush.msra.mxu0 %v88
    %1861 = vmatpush.msra.mxu0 %v87
    %1862 = vmatmul.f32.gmra.mxu0 %v1844
    %v1863 = vpop.f32.mrf.mxu0
    %v1864 = vadd.f32 0.0, %v1863
    %1865 = vdwg.mxu0
    %v1866 = vadd.f32 %v1842, %v1864
    %v1867 = vxor.u32 %v1866, 2147483648
    %v1868 = vmul.f32 %v1867, 1.442695
    %v1869 = vpow.pop %v1868
    %v1870 = vadd.f32 %v1869, 1.0
    %v1871 = vrcp.pop %v1870
    %v1872 = vmul.f32 %v1870, %v1871
    %v1873 = vsub.f32 1.0, %v1872
    %v1874 = vmul.f32 %v1871, %v1873
    %v1875 = vadd.f32 %v1871, %v1874
    %vm1876 = vweird.f32 %v1870
    %vm1877 = vweird.f32 %v1871
    %vm1878 = vmor %vm1876, %vm1877
    %v1879 = vsel %vm1878, %v1871, %v1875
    %v1880 = vand.u32 2147483647, %v1870
    %vm1881 = vcmp.eq.f32.partialorder %v1880, 8.507059e+37
    %v1882 = vand.u32 %v1870, 2147483648
    %v1883 = vor.u32 1.1754944e-38, %v1882
    %v1884 = vsel %vm1881, %v1883, %v1879
    %v1885 = vmul.f32 1.0, %v1884
    %v1886 = vtanh.pop %v1866
    %1887 = vrot.lane.b32.xlu0 %v1886, 64
    %v1888 = vpop.permute.xlu0 %1887
    %v1889 = vmul.f32 %v1885, %v1888
    %v1890 = vmul.f32 %v1885, %v1726
    %1892 = vrot.lane.b32.xlu0 %v1889, 32
    %v1893 = vpop.permute.xlu0 %1892
    %v1895 = vadd.f32 %v1890, %v1893
    %v1896 = vtanh.pop %v1895
    %1898 = vrot.lane.b32.xlu0 %v1896, 64
    %v1899 = vpop.permute.xlu0 %1898
    %v1901 = vmul.f32 %v1885, %v1899
    %1903 = vrot.lane.b32.xlu0 %v1901, 32
    %v1904 = vpop.permute.xlu0 %1903
    %1906 = vst.msk [vmem:[#allocation3 + $0x30] sm:$0xff] %vm186, %v1904
    %1908 = vrot.lane.b32.xlu0 %v1823, 32
    %v1909 = vpop.permute.xlu0 %1908
    %v1910 = vsel %vm186, %v1909, 0
    %1912 = vmatpush.msra.mxu0 0.0
    %1913 = vmatpush.msra.mxu0 0.0
    %1914 = vmatpush.msra.mxu0 0.0
    %1915 = vmatpush.msra.mxu0 0.0
    %1916 = vmatpush.msra.mxu0 0.0
    %1917 = vmatpush.msra.mxu0 0.0
    %1918 = vmatpush.msra.mxu0 0.0
    %1919 = vmatpush.msra.mxu0 0.0
    %1920 = vmatpush.msra.mxu0 0.0
    %1921 = vmatpush.msra.mxu0 0.0
    %1922 = vmatpush.msra.mxu0 0.0
    %1923 = vmatpush.msra.mxu0 0.0
    %1924 = vmatpush.msra.mxu0 %v78
    %1925 = vmatpush.msra.mxu0 %v77
    %1926 = vmatpush.msra.mxu0 %v76
    %1927 = vmatpush.msra.mxu0 %v75
    %1928 = vmatmul.f32.gmra.mxu0 %v1910
    %v1929 = vpop.f32.mrf.mxu0
    %v1930 = vadd.f32 %v98, %v1929
    %1931 = vdwg.mxu0
    %v1932 = vsel %vm186, %v1904, 0
    %1934 = vmatpush.msra.mxu0 0.0
    %1935 = vmatpush.msra.mxu0 0.0
    %1936 = vmatpush.msra.mxu0 0.0
    %1937 = vmatpush.msra.mxu0 0.0
    %1938 = vmatpush.msra.mxu0 0.0
    %1939 = vmatpush.msra.mxu0 0.0
    %1940 = vmatpush.msra.mxu0 0.0
    %1941 = vmatpush.msra.mxu0 0.0
    %1942 = vmatpush.msra.mxu0 0.0
    %1943 = vmatpush.msra.mxu0 0.0
    %1944 = vmatpush.msra.mxu0 0.0
    %1945 = vmatpush.msra.mxu0 0.0
    %1946 = vmatpush.msra.mxu0 %v90
    %1947 = vmatpush.msra.mxu0 %v89
    %1948 = vmatpush.msra.mxu0 %v88
    %1949 = vmatpush.msra.mxu0 %v87
    %1950 = vmatmul.f32.gmra.mxu0 %v1932
    %v1951 = vpop.f32.mrf.mxu0
    %v1952 = vadd.f32 0.0, %v1951
    %1953 = vdwg.mxu0
    %v1954 = vadd.f32 %v1930, %v1952
    %v1955 = vxor.u32 %v1954, 2147483648
    %v1956 = vmul.f32 %v1955, 1.442695
    %v1957 = vpow.pop %v1956
    %v1958 = vadd.f32 %v1957, 1.0
    %v1959 = vrcp.pop %v1958
    %v1960 = vmul.f32 %v1958, %v1959
    %v1961 = vsub.f32 1.0, %v1960
    %v1962 = vmul.f32 %v1959, %v1961
    %v1963 = vadd.f32 %v1959, %v1962
    %vm1964 = vweird.f32 %v1958
    %vm1965 = vweird.f32 %v1959
    %vm1966 = vmor %vm1964, %vm1965
    %v1967 = vsel %vm1966, %v1959, %v1963
    %v1968 = vand.u32 2147483647, %v1958
    %vm1969 = vcmp.eq.f32.partialorder %v1968, 8.507059e+37
    %v1970 = vand.u32 %v1958, 2147483648
    %v1971 = vor.u32 1.1754944e-38, %v1970
    %v1972 = vsel %vm1969, %v1971, %v1967
    %v1973 = vmul.f32 1.0, %v1972
    %v1974 = vtanh.pop %v1954
    %1975 = vrot.lane.b32.xlu0 %v1974, 64
    %v1976 = vpop.permute.xlu0 %1975
    %v1977 = vmul.f32 %v1973, %v1976
    %v1978 = vmul.f32 %v1973, %v1895
    %1980 = vrot.lane.b32.xlu0 %v1977, 32
    %v1981 = vpop.permute.xlu0 %1980
    %v1983 = vadd.f32 %v1978, %v1981
    %v1984 = vtanh.pop %v1983
    %1986 = vrot.lane.b32.xlu0 %v1984, 64
    %v1987 = vpop.permute.xlu0 %1986
    %v1989 = vmul.f32 %v1973, %v1987
    %1991 = vrot.lane.b32.xlu0 %v1989, 32
    %v1992 = vpop.permute.xlu0 %1991
    %1994 = vst.msk [vmem:[#allocation3 + $0x38] sm:$0xff] %vm186, %v1992
    %v1995 = vld [vmem:[#allocation3] sm:$0xff]
    %v1996 = vld [vmem:[#allocation3 + $0x8] sm:$0xff]
    %v1997 = vld [vmem:[#allocation3 + $0x10] sm:$0xff]
    %v1998 = vld [vmem:[#allocation3 + $0x18] sm:$0xff]
    %v1999 = vld [vmem:[#allocation3 + $0x20] sm:$0xff]
    %v2000 = vld [vmem:[#allocation3 + $0x28] sm:$0xff]
    %v2001 = vld [vmem:[#allocation3 + $0x30] sm:$0xff]
    %v2002 = vld [vmem:[#allocation3 + $0x38] sm:$0xff]
    %v2003 = vld [vmem:[#allocation6] sm:$0xff]
    %v2004 = vld [vmem:[#allocation6 + $0x8] sm:$0xff]
    %v2005 = vld [vmem:[#allocation6 + $0x10] sm:$0xff]
    %v2006 = vld [vmem:[#allocation6 + $0x18] sm:$0xff]
    %v2008 = vsel %vm186, %v1995, 0
    %v2011 = vsel %vm186, %v1996, 0
    %v2014 = vsel %vm186, %v1997, 0
    %v2017 = vsel %vm186, %v1998, 0
    %v2020 = vsel %vm186, %v1999, 0
    %v2023 = vsel %vm186, %v2000, 0
    %v2026 = vsel %vm186, %v2001, 0
    %v2029 = vsel %vm186, %v2002, 0
    %2031 = vmatpush.msra.mxu0 0.0
    %2032 = vmatpush.msra.mxu0 0.0
    %2033 = vmatpush.msra.mxu0 0.0
    %2034 = vmatpush.msra.mxu0 0.0
    %2035 = vmatpush.msra.mxu0 0.0
    %2036 = vmatpush.msra.mxu0 0.0
    %2037 = vmatpush.msra.mxu0 0.0
    %2038 = vmatpush.msra.mxu0 0.0
    %2039 = vmatpush.msra.mxu0 0.0
    %2040 = vmatpush.msra.mxu0 0.0
    %2041 = vmatpush.msra.mxu0 0.0
    %2042 = vmatpush.msra.mxu0 0.0
    %2043 = vmatpush.msra.mxu0 %v2006
    %2044 = vmatpush.msra.mxu0 %v2005
    %2045 = vmatpush.msra.mxu0 %v2004
    %2046 = vmatpush.msra.mxu0 %v2003
    %2047 = vmatmul.f32.gmra.mxu0 %v2008
    %v2048 = vpop.f32.mrf.mxu0
    %v2049 = vadd.f32 0.0, %v2048
    %2050 = vmatmul.f32.gmra.mxu0 %v2011
    %v2051 = vpop.f32.mrf.mxu0
    %v2052 = vadd.f32 0.0, %v2051
    %2053 = vmatmul.f32.gmra.mxu0 %v2014
    %v2054 = vpop.f32.mrf.mxu0
    %v2055 = vadd.f32 0.0, %v2054
    %2056 = vmatmul.f32.gmra.mxu0 %v2017
    %v2057 = vpop.f32.mrf.mxu0
    %v2058 = vadd.f32 0.0, %v2057
    %2059 = vmatmul.f32.gmra.mxu0 %v2020
    %v2060 = vpop.f32.mrf.mxu0
    %v2061 = vadd.f32 0.0, %v2060
    %2062 = vmatmul.f32.gmra.mxu0 %v2023
    %v2063 = vpop.f32.mrf.mxu0
    %v2064 = vadd.f32 0.0, %v2063
    %2065 = vmatmul.f32.gmra.mxu0 %v2026
    %v2066 = vpop.f32.mrf.mxu0
    %v2067 = vadd.f32 0.0, %v2066
    %2068 = vmatmul.f32.gmra.mxu0 %v2029
    %v2069 = vpop.f32.mrf.mxu0
    %v2070 = vadd.f32 0.0, %v2069
    %2071 = vdwg.mxu0
    %vm2072 = vcmask 31744
    %2073 = vst.msk [vmem:[%s11] sm:$0xff] %vm2072, %v2049
    %2074 = vst.msk [vmem:[%s11 + $0x8] sm:$0xff] %vm2072, %v2052
    %2075 = vst.msk [vmem:[%s11 + $0x10] sm:$0xff] %vm2072, %v2055
    %2076 = vst.msk [vmem:[%s11 + $0x18] sm:$0xff] %vm2072, %v2058
    %2077 = vst.msk [vmem:[%s11 + $0x20] sm:$0xff] %vm2072, %v2061
    %2078 = vst.msk [vmem:[%s11 + $0x28] sm:$0xff] %vm2072, %v2064
    %2079 = vst.msk [vmem:[%s11 + $0x30] sm:$0xff] %vm2072, %v2067
    %2080 = vst.msk [vmem:[%s11 + $0x38] sm:$0xff] %vm2072, %v2070
    // Predicated region
    $region54: #{_lambda_.1} parent=1 // pred_check
      _
    $region55: #{_lambda_.1} parent=1 // pred_check_branch
      %2082 = sbr.rel (0) target = $region57
    $region56: #{_lambda_.1} parent=1 // pred_region
      _
    $region57: #{_lambda_.1} parent=1 // pred_fallthru
      _
    // Predicated region
    $region58: #{_lambda_.1} parent=1 // pred_check
      _
    $region59: #{_lambda_.1} parent=1 // pred_check_branch
      %2084 = sbr.rel (0) target = $region61
    $region60: #{_lambda_.1} parent=1 // pred_region
      _
    $region61: #{_lambda_.1} parent=1 // pred_fallthru
      _
    %2085 = vsyncpa [#allocation5], 1
    %2086 = vsyncpa [#allocation7], 1

</llo_original>
